<compile_context>
chip_gen: v6e
topology: v6e:2x2x1
jax: 0.10.0
libtpu: 0.0.40
codegen_flags: <defaults>
</compile_context>

<pallas_src>
import functools

import jax
import jax.numpy as jnp
from jax.experimental import pallas as pl
from jax.experimental.pallas import tpu as pltpu


def _vmem_specs(n):
    return [pl.BlockSpec(memory_space=pltpu.MemorySpace.VMEM) for _ in range(n)]


_VMEM_OUT = pl.BlockSpec(memory_space=pltpu.MemorySpace.VMEM)


# ----------------------------- Pallas kernel ------------------------------- #

def pinsage_forward_kernel(n_layers, proj_w_ref, proj_b_ref, feats_ref, *rest):
    """proj -> n_layers x WeightedSAGEConv -> residual -> scorer -> hinge.

    rest = [adj_0, inv_ws_0, qw_0, qb_0, w2_0, wb_0, ...,     (6 per layer)
            bias_row, bias_col, uv_u, uv_v, out_ref]
    Weights / activations on the MXU are bf16 with f32 accumulation; all
    elementwise epilogues stay f32 (v5e-safe: no bf16 VPU/EUP there).
    """
    layer_refs = rest[:6 * n_layers]
    bias_row_ref, bias_col_ref, u_ref, v_ref, out_ref = rest[6 * n_layers:]

    n_seed = bias_row_ref.shape[1]          # padded seed count
    e_pad = out_ref.shape[1]                # padded edges per graph

    # LinearProjector: h_item = feats @ Wp + bp   (bf16 MXU, f32 accumulate).
    h_item = (
        jnp.dot(feats_ref[...], proj_w_ref[...],
                preferred_element_type=jnp.float32)
        + proj_b_ref[...]
    )
    # Residual uses only the dst-prefix rows; carrying just this slice bounds
    # h_item's live range (it dies once layer 0 consumes it as h).
    res = h_item[:n_seed, :]
    h = h_item

    for l in range(n_layers):
        adj_ref, inv_ws_ref, qw_ref, qb_ref, w2_ref, wb_ref = \
            layer_refs[6 * l:6 * (l + 1)]
        a = adj_ref[...]                                  # bf16 (n_dst, n_src)
        n_dst = a.shape[0]

        h_src = h.astype(jnp.bfloat16)
        m = jnp.maximum(
            jnp.dot(h_src, qw_ref[...], preferred_element_type=jnp.float32)
            + qb_ref[...],
            0.0,
        )
        # Weighted mean aggregation; 1/ws precomputed exactly on host (f32).
        agg = jnp.dot(a, m.astype(jnp.bfloat16),
                      preferred_element_type=jnp.float32) * inv_ws_ref[...]

        # Single K=2*D output matmul: [agg | h_dst] @ [wn ; wh] + wb.
        cat = jnp.concatenate([agg.astype(jnp.bfloat16), h_src[:n_dst]],
                              axis=-1)
        z = jnp.maximum(
            jnp.dot(cat, w2_ref[...], preferred_element_type=jnp.float32)
            + wb_ref[...],
            0.0,
        )
        sumsq = jnp.sum(z * z, axis=-1, keepdims=True)
        inv_norm = jnp.where(sumsq == 0.0, 1.0, jax.lax.rsqrt(sumsq))
        h = z * inv_norm

    hf = res + h[:n_seed, :]                              # (n_seed, D) f32

    # ItemToItemScorer + hinge, edge gathers done in-kernel via one-hot matmuls
    # against the tiny biased Gram matrix (bias folded in once, no M=1 dots).
    g = jax.lax.dot_general(hf, hf, (((1,), (1,)), ((), ())),
                            preferred_element_type=jnp.float32)
    g = g + bias_row_ref[...] + bias_col_ref[...]         # g[u,v]+b_u+b_v

    node_ids = jax.lax.broadcasted_iota(jnp.int32, (n_seed, 2 * e_pad), 0)
    oh_u = (node_ids == u_ref[...]).astype(jnp.float32)   # (N, 2*E_pad)
    oh_v = (node_ids == v_ref[...]).astype(jnp.float32)

    # score_e = sum_i oh_u[i,e] * (g @ oh_v)[i,e];  pos || neg stacked on lanes.
    scores = jnp.sum(
        oh_u * jnp.dot(g, oh_v, preferred_element_type=jnp.float32),
        axis=0, keepdims=True)                            # (1, 2*E_pad)
    pos = scores[:, :e_pad]
    neg = scores[:, e_pad:]
    out_ref[...] = jnp.maximum(neg - pos + 1.0, 0.0)


# ------------------------------- Model glue -------------------------------- #

def _ceil_to(n, m):
    return ((n + m - 1) // m) * m


def _pad_axis(x, axis, target, value=0.0):
    size = x.shape[axis]
    if size == target:
        return x
    pw = [(0, 0)] * x.ndim
    pw[axis] = (0, target - size)
    return jnp.pad(x, pw, constant_values=value)


def _linear_init(key, fan_in, fan_out):
    kw, kb = jax.random.split(key)
    bound = 1.0 / jnp.sqrt(jnp.float32(fan_in))
    w = jax.random.uniform(kw, (fan_in, fan_out), jnp.float32, -bound, bound)
    b = jax.random.uniform(kb, (fan_out,), jnp.float32, -bound, bound)
    return w, b


class PinSAGEModelPallas:
    def __init__(self, in_dims, hidden_dims, n_layers, n_nodes, key):
        keys = jax.random.split(key, 1 + 2 * n_layers)
        self.in_dims = in_dims
        self.in_pad = _ceil_to(in_dims, 128)          # fill the MXU K dim
        # LinearProjector (simplified to one dense Linear -> hidden_dims).
        pw, pb = _linear_init(keys[0], in_dims, hidden_dims)
        self.proj_w = _pad_axis(pw, 0, self.in_pad).astype(jnp.bfloat16)
        self.proj_b = pb.reshape(1, -1)               # f32 (1, D)
        # SAGENet: n_layers x WeightedSAGEConv(hidden, hidden, hidden).
        # W is kept STACKED (2D, D): rows [:D] multiply agg, rows [D:] h_dst.
        self.sage = []
        for l in range(n_layers):
            qw, qb = _linear_init(keys[1 + 2 * l], hidden_dims, hidden_dims)
            w2, wb = _linear_init(keys[2 + 2 * l], 2 * hidden_dims, hidden_dims)
            self.sage.append({
                "qw": qw.astype(jnp.bfloat16),
                "qb": qb.reshape(1, -1),
                "w2": w2.astype(jnp.bfloat16),
                "wb": wb.reshape(1, -1),
            })
        # ItemToItemScorer: per-node bias, zeros (as in the module).
        self.scorer_bias = jnp.zeros((n_nodes,), jnp.float32)

    def forward(self, pos_edges, neg_edges, blocks, src_feats):
        n_layers = len(blocks)
        n_seed = blocks[-1].shape[0]
        n_seed_pad = _ceil_to(n_seed, 8)

        # Frontier sizes: frontier[0] = blocks[0].srcdata, frontier[l+1] =
        # blocks[l].dstdata.  Every frontier that serves as an n_src / K axis
        # gets lane padding (128); the seed frontier only needs sublane (8).
        frontier = [src_feats.shape[0]] + [b.shape[0] for b in blocks]
        fpad = [_ceil_to(f, 128) for f in frontier[:-1]] + [n_seed_pad]

        feats = _pad_axis(_pad_axis(src_feats, 0, fpad[0]), 1, self.in_pad)
        feats = feats.astype(jnp.bfloat16)             # half the feats DMA

        args = [self.proj_w, self.proj_b, feats]
        for l, (layer, adj) in enumerate(zip(self.sage, blocks)):
            # Exact f32 clamp(row-sum, 1) reciprocal computed host-side.
            ws = jnp.maximum(jnp.sum(adj, axis=-1, keepdims=True), 1.0)
            inv_ws = _pad_axis(1.0 / ws, 0, fpad[l + 1], value=1.0)
            adj_p = _pad_axis(_pad_axis(adj, 1, fpad[l]), 0, fpad[l + 1])
            args += [adj_p.astype(jnp.bfloat16), inv_ws,
                     layer["qw"], layer["qb"], layer["w2"], layer["wb"]]

        pu, pv = pos_edges
        nu, nv = neg_edges
        e = pu.shape[0]
        e_pad = pl.cdiv(e, 128) * 128                  # lane-dense output width

        def pad_idx(x):
            return jnp.pad(x.astype(jnp.int32), (0, e_pad - x.shape[0]))

        # Pos and neg edges stacked along lanes -> one one-hot / one MXU pass.
        u_all = jnp.concatenate([pad_idx(pu), pad_idx(nu)]).reshape(1, 2 * e_pad)
        v_all = jnp.concatenate([pad_idx(pv), pad_idx(nv)]).reshape(1, 2 * e_pad)

        bias = _pad_axis(self.scorer_bias, 0, n_seed_pad)
        bias_row = bias.reshape(1, n_seed_pad)
        bias_col = bias.reshape(n_seed_pad, 1)
        args += [bias_row, bias_col, u_all, v_all]

        out_shape = jax.ShapeDtypeStruct((1, e_pad), jnp.float32)

        # Scoped VMEM sized to the actual resident footprint (with headroom).
        resident = sum(int(a.size) * a.dtype.itemsize for a in args) + 4 * e_pad
        vmem_limit = int(min(64 * 1024 * 1024,
                             max(16 * 1024 * 1024, 4 * resident)))

        kernel = functools.partial(pinsage_forward_kernel, n_layers)
        out = pl.pallas_call(
            kernel,
            out_shape=out_shape,
            in_specs=_vmem_specs(len(args)),
            out_specs=_VMEM_OUT,
            compiler_params=pltpu.CompilerParams(vmem_limit_bytes=vmem_limit),
        )(*args)
        return out[0, :e]


if __name__ == "__main__":
    in_dims, hidden_dims, n_layers = 64, 128, 2
    N0, N1, N2, E = 64, 32, 16, 100   # frontier sizes per block + edges/graph

    key = jax.random.PRNGKey(0)
    k_feat, k_a0, k_a1, k_pu, k_pv, k_nv = jax.random.split(key, 6)

    # node features of blocks[0].srcdata (seed nodes are the first N2 rows)
    feats = jax.random.normal(k_feat, (N0, in_dims), jnp.float32)
    # dense message-flow blocks with non-negative edge weights (visit counts)
    adj0 = jax.random.uniform(k_a0, (N1, N0), jnp.float32)   # block 0: N0 -> N1
    adj1 = jax.random.uniform(k_a1, (N2, N1), jnp.float32)   # block 1: N1 -> N2

    # pos / neg item-item graphs over the N2 seed nodes
    pos_u = jax.random.randint(k_pu, (E,), 0, N2)
    pos_v = jax.random.randint(k_pv, (E,), 0, N2)
    neg_u = pos_u                                  # same heads, resampled tails
    neg_v = jax.random.randint(k_nv, (E,), 0, N2)

    model = PinSAGEModelPallas(in_dims, hidden_dims, n_layers,
                               n_nodes=N2, key=jax.random.PRNGKey(42))
    out = model.forward((pos_u, pos_v), (neg_u, neg_v), [adj0, adj1], feats)
    out = jax.block_until_ready(out)

    assert out.shape == (E,)
    assert bool(jnp.all(out >= 0.0)) and bool(jnp.all(jnp.isfinite(out)))
    print("KERNEL_OK")
</pallas_src>

<mosaic_0001>
module attributes {stable_mosaic.version = 11 : i64} {
  func.func @pinsage_forward_kernel(%arg0: memref<128x128xbf16, #tpu.memory_space<vmem>>, %arg1: memref<1x128xf32, #tpu.memory_space<vmem>>, %arg2: memref<128x128xbf16, #tpu.memory_space<vmem>>, %arg3: memref<128x128xbf16, #tpu.memory_space<vmem>>, %arg4: memref<128x1xf32, #tpu.memory_space<vmem>>, %arg5: memref<128x128xbf16, #tpu.memory_space<vmem>>, %arg6: memref<1x128xf32, #tpu.memory_space<vmem>>, %arg7: memref<256x128xbf16, #tpu.memory_space<vmem>>, %arg8: memref<1x128xf32, #tpu.memory_space<vmem>>, %arg9: memref<16x128xbf16, #tpu.memory_space<vmem>>, %arg10: memref<16x1xf32, #tpu.memory_space<vmem>>, %arg11: memref<128x128xbf16, #tpu.memory_space<vmem>>, %arg12: memref<1x128xf32, #tpu.memory_space<vmem>>, %arg13: memref<256x128xbf16, #tpu.memory_space<vmem>>, %arg14: memref<1x128xf32, #tpu.memory_space<vmem>>, %arg15: memref<1x16xf32, #tpu.memory_space<vmem>>, %arg16: memref<16x1xf32, #tpu.memory_space<vmem>>, %arg17: memref<1x256xi32, #tpu.memory_space<vmem>>, %arg18: memref<1x256xi32, #tpu.memory_space<vmem>>, %arg19: memref<1x128xf32, #tpu.memory_space<vmem>>) attributes {dimension_semantics = [], scalar_prefetch = 0 : i64, scratch_operands = 0 : i64, tpu.core_type = #tpu.core_type<tc>} {
    %c0 = arith.constant 0 : index
    %c0_0 = arith.constant 0 : index
    %0 = vector.load %arg2[%c0, %c0_0] : memref<128x128xbf16, #tpu.memory_space<vmem>>, vector<128x128xbf16>
    %c0_1 = arith.constant 0 : index
    %c0_2 = arith.constant 0 : index
    %1 = vector.load %arg0[%c0_1, %c0_2] : memref<128x128xbf16, #tpu.memory_space<vmem>>, vector<128x128xbf16>
    %cst = arith.constant dense<0.000000e+00> : vector<128x128xf32>
    %2 = tpu.matmul %0, %1, %cst {dimension_numbers = #tpu.dot_dimension_numbers<[1], [0], [0], [1], [0, 0, 1, 1], [], []>} : vector<128x128xbf16>, vector<128x128xbf16>, vector<128x128xf32> -> vector<128x128xf32>
    %c0_3 = arith.constant 0 : index
    %c0_4 = arith.constant 0 : index
    %3 = vector.load %arg1[%c0_3, %c0_4] : memref<1x128xf32, #tpu.memory_space<vmem>>, vector<1x128xf32>
    %4 = vector.broadcast %3 : vector<1x128xf32> to vector<128x128xf32>
    %5 = arith.addf %2, %4 : vector<128x128xf32>
    %6 = vector.extract_strided_slice %5 {offsets = [0, 0], sizes = [16, 128], strides = [1, 1]} : vector<128x128xf32> to vector<16x128xf32>
    %c0_5 = arith.constant 0 : index
    %c0_6 = arith.constant 0 : index
    %7 = vector.load %arg3[%c0_5, %c0_6] : memref<128x128xbf16, #tpu.memory_space<vmem>>, vector<128x128xbf16>
    %8 = arith.truncf %5 : vector<128x128xf32> to vector<128x128xbf16>
    %c0_7 = arith.constant 0 : index
    %c0_8 = arith.constant 0 : index
    %9 = vector.load %arg5[%c0_7, %c0_8] : memref<128x128xbf16, #tpu.memory_space<vmem>>, vector<128x128xbf16>
    %cst_9 = arith.constant dense<0.000000e+00> : vector<128x128xf32>
    %10 = tpu.matmul %8, %9, %cst_9 {dimension_numbers = #tpu.dot_dimension_numbers<[1], [0], [0], [1], [0, 0, 1, 1], [], []>} : vector<128x128xbf16>, vector<128x128xbf16>, vector<128x128xf32> -> vector<128x128xf32>
    %c0_10 = arith.constant 0 : index
    %c0_11 = arith.constant 0 : index
    %11 = vector.load %arg6[%c0_10, %c0_11] : memref<1x128xf32, #tpu.memory_space<vmem>>, vector<1x128xf32>
    %12 = vector.broadcast %11 : vector<1x128xf32> to vector<128x128xf32>
    %13 = arith.addf %10, %12 : vector<128x128xf32>
    %cst_12 = arith.constant 0.000000e+00 : f32
    %14 = vector.broadcast %cst_12 : f32 to vector<128x128xf32>
    %15 = arith.maximumf %13, %14 : vector<128x128xf32>
    %16 = arith.truncf %15 : vector<128x128xf32> to vector<128x128xbf16>
    %cst_13 = arith.constant dense<0.000000e+00> : vector<128x128xf32>
    %17 = tpu.matmul %7, %16, %cst_13 {dimension_numbers = #tpu.dot_dimension_numbers<[1], [0], [0], [1], [0, 0, 1, 1], [], []>} : vector<128x128xbf16>, vector<128x128xbf16>, vector<128x128xf32> -> vector<128x128xf32>
    %c0_14 = arith.constant 0 : index
    %c0_15 = arith.constant 0 : index
    %18 = vector.load %arg4[%c0_14, %c0_15] : memref<128x1xf32, #tpu.memory_space<vmem>>, vector<128x1xf32>
    %19 = vector.broadcast %18 : vector<128x1xf32> to vector<128x128xf32>
    %20 = arith.mulf %17, %19 : vector<128x128xf32>
    %21 = arith.truncf %20 : vector<128x128xf32> to vector<128x128xbf16>
    %22 = tpu.concatenate %21, %8 in 1 : vector<128x128xbf16>, vector<128x128xbf16> -> vector<128x256xbf16>
    %c0_16 = arith.constant 0 : index
    %c0_17 = arith.constant 0 : index
    %23 = vector.load %arg7[%c0_16, %c0_17] : memref<256x128xbf16, #tpu.memory_space<vmem>>, vector<256x128xbf16>
    %cst_18 = arith.constant dense<0.000000e+00> : vector<128x128xf32>
    %24 = tpu.matmul %22, %23, %cst_18 {dimension_numbers = #tpu.dot_dimension_numbers<[1], [0], [0], [1], [0, 0, 1, 1], [], []>} : vector<128x256xbf16>, vector<256x128xbf16>, vector<128x128xf32> -> vector<128x128xf32>
    %c0_19 = arith.constant 0 : index
    %c0_20 = arith.constant 0 : index
    %25 = vector.load %arg8[%c0_19, %c0_20] : memref<1x128xf32, #tpu.memory_space<vmem>>, vector<1x128xf32>
    %26 = vector.broadcast %25 : vector<1x128xf32> to vector<128x128xf32>
    %27 = arith.addf %24, %26 : vector<128x128xf32>
    %cst_21 = arith.constant 0.000000e+00 : f32
    %28 = vector.broadcast %cst_21 : f32 to vector<128x128xf32>
    %29 = arith.maximumf %27, %28 : vector<128x128xf32>
    %30 = arith.mulf %29, %29 : vector<128x128xf32>
    %cst_22 = arith.constant dense<0.000000e+00> : vector<128xf32>
    %31 = vector.multi_reduction <add>, %30, %cst_22 [1] : vector<128x128xf32> to vector<128xf32>
    %32 = vector.shape_cast %31 : vector<128xf32> to vector<128x1xf32>
    %cst_23 = arith.constant 0.000000e+00 : f32
    %33 = vector.broadcast %cst_23 : f32 to vector<128x1xf32>
    %34 = arith.cmpf oeq, %32, %33 : vector<128x1xf32>
    %35 = math.rsqrt %32 : vector<128x1xf32>
    %cst_24 = arith.constant 1.000000e+00 : f32
    %36 = vector.broadcast %cst_24 : f32 to vector<128x1xf32>
    %37 = arith.select %34, %36, %35 : vector<128x1xi1>, vector<128x1xf32>
    %38 = vector.broadcast %37 : vector<128x1xf32> to vector<128x128xf32>
    %39 = arith.mulf %29, %38 : vector<128x128xf32>
    %c0_25 = arith.constant 0 : index
    %c0_26 = arith.constant 0 : index
    %40 = vector.load %arg9[%c0_25, %c0_26] : memref<16x128xbf16, #tpu.memory_space<vmem>>, vector<16x128xbf16>
    %41 = arith.truncf %39 : vector<128x128xf32> to vector<128x128xbf16>
    %c0_27 = arith.constant 0 : index
    %c0_28 = arith.constant 0 : index
    %42 = vector.load %arg11[%c0_27, %c0_28] : memref<128x128xbf16, #tpu.memory_space<vmem>>, vector<128x128xbf16>
    %cst_29 = arith.constant dense<0.000000e+00> : vector<128x128xf32>
    %43 = tpu.matmul %41, %42, %cst_29 {dimension_numbers = #tpu.dot_dimension_numbers<[1], [0], [0], [1], [0, 0, 1, 1], [], []>} : vector<128x128xbf16>, vector<128x128xbf16>, vector<128x128xf32> -> vector<128x128xf32>
    %c0_30 = arith.constant 0 : index
    %c0_31 = arith.constant 0 : index
    %44 = vector.load %arg12[%c0_30, %c0_31] : memref<1x128xf32, #tpu.memory_space<vmem>>, vector<1x128xf32>
    %45 = vector.broadcast %44 : vector<1x128xf32> to vector<128x128xf32>
    %46 = arith.addf %43, %45 : vector<128x128xf32>
    %cst_32 = arith.constant 0.000000e+00 : f32
    %47 = vector.broadcast %cst_32 : f32 to vector<128x128xf32>
    %48 = arith.maximumf %46, %47 : vector<128x128xf32>
    %49 = arith.truncf %48 : vector<128x128xf32> to vector<128x128xbf16>
    %cst_33 = arith.constant dense<0.000000e+00> : vector<16x128xf32>
    %50 = tpu.matmul %40, %49, %cst_33 {dimension_numbers = #tpu.dot_dimension_numbers<[1], [0], [0], [1], [0, 0, 1, 1], [], []>} : vector<16x128xbf16>, vector<128x128xbf16>, vector<16x128xf32> -> vector<16x128xf32>
    %c0_34 = arith.constant 0 : index
    %c0_35 = arith.constant 0 : index
    %51 = vector.load %arg10[%c0_34, %c0_35] : memref<16x1xf32, #tpu.memory_space<vmem>>, vector<16x1xf32>
    %52 = vector.broadcast %51 : vector<16x1xf32> to vector<16x128xf32>
    %53 = arith.mulf %50, %52 : vector<16x128xf32>
    %54 = arith.truncf %53 : vector<16x128xf32> to vector<16x128xbf16>
    %55 = vector.extract_strided_slice %41 {offsets = [0, 0], sizes = [16, 128], strides = [1, 1]} : vector<128x128xbf16> to vector<16x128xbf16>
    %56 = tpu.concatenate %54, %55 in 1 : vector<16x128xbf16>, vector<16x128xbf16> -> vector<16x256xbf16>
    %c0_36 = arith.constant 0 : index
    %c0_37 = arith.constant 0 : index
    %57 = vector.load %arg13[%c0_36, %c0_37] : memref<256x128xbf16, #tpu.memory_space<vmem>>, vector<256x128xbf16>
    %cst_38 = arith.constant dense<0.000000e+00> : vector<16x128xf32>
    %58 = tpu.matmul %56, %57, %cst_38 {dimension_numbers = #tpu.dot_dimension_numbers<[1], [0], [0], [1], [0, 0, 1, 1], [], []>} : vector<16x256xbf16>, vector<256x128xbf16>, vector<16x128xf32> -> vector<16x128xf32>
    %c0_39 = arith.constant 0 : index
    %c0_40 = arith.constant 0 : index
    %59 = vector.load %arg14[%c0_39, %c0_40] : memref<1x128xf32, #tpu.memory_space<vmem>>, vector<1x128xf32>
    %60 = vector.broadcast %59 : vector<1x128xf32> to vector<16x128xf32>
    %61 = arith.addf %58, %60 : vector<16x128xf32>
    %cst_41 = arith.constant 0.000000e+00 : f32
    %62 = vector.broadcast %cst_41 : f32 to vector<16x128xf32>
    %63 = arith.maximumf %61, %62 : vector<16x128xf32>
    %64 = arith.mulf %63, %63 : vector<16x128xf32>
    %cst_42 = arith.constant dense<0.000000e+00> : vector<16xf32>
    %65 = vector.multi_reduction <add>, %64, %cst_42 [1] : vector<16x128xf32> to vector<16xf32>
    %66 = vector.shape_cast %65 : vector<16xf32> to vector<16x1xf32>
    %cst_43 = arith.constant 0.000000e+00 : f32
    %67 = vector.broadcast %cst_43 : f32 to vector<16x1xf32>
    %68 = arith.cmpf oeq, %66, %67 : vector<16x1xf32>
    %69 = math.rsqrt %66 : vector<16x1xf32>
    %cst_44 = arith.constant 1.000000e+00 : f32
    %70 = vector.broadcast %cst_44 : f32 to vector<16x1xf32>
    %71 = arith.select %68, %70, %69 : vector<16x1xi1>, vector<16x1xf32>
    %72 = vector.broadcast %71 : vector<16x1xf32> to vector<16x128xf32>
    %73 = arith.mulf %63, %72 : vector<16x128xf32>
    %74 = arith.addf %6, %73 : vector<16x128xf32>
    %cst_45 = arith.constant dense<0.000000e+00> : vector<16x16xf32>
    %75 = tpu.matmul %74, %74, %cst_45 {dimension_numbers = #tpu.dot_dimension_numbers<[1], [1], [0], [0], [0, 0, 1, 0], [], []>} : vector<16x128xf32>, vector<16x128xf32>, vector<16x16xf32> -> vector<16x16xf32>
    %c0_46 = arith.constant 0 : index
    %c0_47 = arith.constant 0 : index
    %76 = vector.load %arg15[%c0_46, %c0_47] : memref<1x16xf32, #tpu.memory_space<vmem>>, vector<1x16xf32>
    %77 = vector.broadcast %76 : vector<1x16xf32> to vector<16x16xf32>
    %78 = arith.addf %75, %77 : vector<16x16xf32>
    %c0_48 = arith.constant 0 : index
    %c0_49 = arith.constant 0 : index
    %79 = vector.load %arg16[%c0_48, %c0_49] : memref<16x1xf32, #tpu.memory_space<vmem>>, vector<16x1xf32>
    %80 = vector.broadcast %79 : vector<16x1xf32> to vector<16x16xf32>
    %81 = arith.addf %78, %80 : vector<16x16xf32>
    %82 = tpu.iota {dimensions = array<i32: 0>} : vector<16x256xi32>
    %c0_50 = arith.constant 0 : index
    %c0_51 = arith.constant 0 : index
    %83 = vector.load %arg17[%c0_50, %c0_51] : memref<1x256xi32, #tpu.memory_space<vmem>>, vector<1x256xi32>
    %84 = vector.broadcast %83 : vector<1x256xi32> to vector<16x256xi32>
    %85 = arith.cmpi eq, %82, %84 : vector<16x256xi32>
    %86 = arith.extui %85 : vector<16x256xi1> to vector<16x256xi32>
    %87 = arith.sitofp %86 : vector<16x256xi32> to vector<16x256xf32>
    %c0_52 = arith.constant 0 : index
    %c0_53 = arith.constant 0 : index
    %88 = vector.load %arg18[%c0_52, %c0_53] : memref<1x256xi32, #tpu.memory_space<vmem>>, vector<1x256xi32>
    %89 = vector.broadcast %88 : vector<1x256xi32> to vector<16x256xi32>
    %90 = arith.cmpi eq, %82, %89 : vector<16x256xi32>
    %91 = arith.extui %90 : vector<16x256xi1> to vector<16x256xi32>
    %92 = arith.sitofp %91 : vector<16x256xi32> to vector<16x256xf32>
    %cst_54 = arith.constant dense<0.000000e+00> : vector<16x256xf32>
    %93 = tpu.matmul %81, %92, %cst_54 {dimension_numbers = #tpu.dot_dimension_numbers<[1], [0], [0], [1], [0, 0, 1, 1], [], []>} : vector<16x16xf32>, vector<16x256xf32>, vector<16x256xf32> -> vector<16x256xf32>
    %94 = arith.mulf %87, %93 : vector<16x256xf32>
    %cst_55 = arith.constant dense<0.000000e+00> : vector<256xf32>
    %95 = vector.multi_reduction <add>, %94, %cst_55 [0] : vector<16x256xf32> to vector<256xf32>
    %96 = vector.shape_cast %95 : vector<256xf32> to vector<1x256xf32>
    %97 = vector.extract_strided_slice %96 {offsets = [0, 0], sizes = [1, 128], strides = [1, 1]} : vector<1x256xf32> to vector<1x128xf32>
    %98 = vector.extract_strided_slice %96 {offsets = [0, 128], sizes = [1, 128], strides = [1, 1]} : vector<1x256xf32> to vector<1x128xf32>
    %99 = arith.subf %98, %97 : vector<1x128xf32>
    %cst_56 = arith.constant 1.000000e+00 : f32
    %100 = vector.broadcast %cst_56 : f32 to vector<1x128xf32>
    %101 = arith.addf %99, %100 : vector<1x128xf32>
    %cst_57 = arith.constant 0.000000e+00 : f32
    %102 = vector.broadcast %cst_57 : f32 to vector<1x128xf32>
    %103 = arith.maximumf %101, %102 : vector<1x128xf32>
    %c0_58 = arith.constant 0 : index
    %c0_59 = arith.constant 0 : index
    %104 = vector.load %arg19[%c0_58, %c0_59] : memref<1x128xf32, #tpu.memory_space<vmem>>, vector<1x128xf32>
    tpu.vector_store %arg19[%c0_58, %c0_59], %103 {strides = array<i32>} : memref<1x128xf32, #tpu.memory_space<vmem>>, vector<1x128xf32>,
    return
  }
}

</mosaic_0001>

<llo_original>
// kernel: tpu_custom_call.1
$region0: #{tpu_custom_call.1}
  #allocation0 [shape = 'u32[]', space=smem, size = 0x4, offset = 0x4, fixed_abs, tag = 'smem constant byte address 0x4 - core index']
  #allocation1 [shape = 'u32[144,128]{1,0:T(1,128)}', space=vmem, size = 0x12000, scoped, tag = 'internal scratch']
  %s0 = inlined_call_operand.hbm [shape: bf16[128,128], index: 0, kind: input, shape index: {}]
  %s1 = inlined_call_operand.vmem [shape: f32[1,128], index: 1, kind: input, shape index: {}]
  %s2 = inlined_call_operand.hbm [shape: bf16[128,128], index: 2, kind: input, shape index: {}]
  %s3 = inlined_call_operand.hbm [shape: bf16[128,128], index: 3, kind: input, shape index: {}]
  %s4 = inlined_call_operand.vmem [shape: f32[128,1], index: 4, kind: input, shape index: {}]
  %s5 = inlined_call_operand.hbm [shape: bf16[128,128], index: 5, kind: input, shape index: {}]
  %s6 = inlined_call_operand.vmem [shape: f32[1,128], index: 6, kind: input, shape index: {}]
  %s7 = inlined_call_operand.vmem [shape: bf16[256,128], index: 7, kind: input, shape index: {}]
  %s8 = inlined_call_operand.vmem [shape: f32[1,128], index: 8, kind: input, shape index: {}]
  %s9 = inlined_call_operand.vmem [shape: bf16[16,128], index: 9, kind: input, shape index: {}]
  %s10 = inlined_call_operand.vmem [shape: f32[16,1], index: 10, kind: input, shape index: {}]
  %s11 = inlined_call_operand.hbm [shape: bf16[128,128], index: 11, kind: input, shape index: {}]
  %s12 = inlined_call_operand.vmem [shape: f32[1,128], index: 12, kind: input, shape index: {}]
  %s13 = inlined_call_operand.hbm [shape: bf16[256,128], index: 13, kind: input, shape index: {}]
  %s14 = inlined_call_operand.vmem [shape: f32[1,128], index: 14, kind: input, shape index: {}]
  %s15 = inlined_call_operand.vmem [shape: f32[1,16], index: 15, kind: input, shape index: {}]
  %s16 = inlined_call_operand.vmem [shape: f32[16,1], index: 16, kind: input, shape index: {}]
  %s17 = inlined_call_operand.vmem [shape: s32[1,256], index: 17, kind: input, shape index: {}]
  %s18 = inlined_call_operand.vmem [shape: s32[1,256], index: 18, kind: input, shape index: {}]
  %s19 = inlined_call_operand.hbm [shape: f32[1,128], index: 19, kind: output, shape index: {}]
  %s20 = sld [smem:[#allocation0]]
  $region110: #{tpu_custom_call.1} parent=0
    _
  %s22 = ssub.s32 1, %s20
  %s23 = scalar_select 0, %s22, %s20
  $region1: #{tpu_custom_call.1} parent=0
    #allocation2 [shape = 'u8[32768]{0}', space=vmem, size = 0x8000, scoped, tag = 'input window, operand 0, single buffered']
    #allocation3 [shape = 's32[1]{0}', space=sflag, size = 0x4, scoped, tag = 'scoped memory for tpu_custom_call.1']
    #allocation4 [shape = 's32[1]{0}', space=sflag, size = 0x4, scoped, tag = 'scoped memory for tpu_custom_call.1']
    #allocation5 [shape = 'u8[32768]{0}', space=vmem, size = 0x8000, scoped, tag = 'input window, operand 2, single buffered']
    #allocation6 [shape = 's32[1]{0}', space=sflag, size = 0x4, scoped, tag = 'scoped memory for tpu_custom_call.1']
    #allocation7 [shape = 'u8[32768]{0}', space=vmem, size = 0x8000, scoped, tag = 'input window, operand 3, single buffered']
    #allocation8 [shape = 'u8[32768]{0}', space=vmem, size = 0x8000, scoped, tag = 'input window, operand 5, single buffered']
    #allocation9 [shape = 's32[1]{0}', space=sflag, size = 0x4, scoped, tag = 'scoped memory for tpu_custom_call.1']
    #allocation10 [shape = 'u8[32768]{0}', space=vmem, size = 0x8000, scoped, tag = 'input window, operand 11, single buffered']
    #allocation11 [shape = 'u8[65536]{0}', space=vmem, size = 0x10000, scoped, tag = 'input window, operand 13, single buffered']
    #allocation12 [shape = 's32[1]{0}', space=sflag, size = 0x4, scoped, tag = 'scoped memory for tpu_custom_call.1']
    #allocation13 [shape = 'u8[512]{0}', space=vmem, size = 0x400, scoped, tag = 'output window, operand 0, single buffered']
    %24 = vsyncpa [#allocation3], 0
    %25 = vsyncpa [#allocation6], 0
    %26 = vsyncpa [#allocation9], 0
    %27 = vsyncpa [#allocation12], 0
    %28 = vsyncpa [#allocation4], 0
    // Predicated region
    $region2: #{tpu_custom_call.1} parent=1 // pred_check
      _
    $region3: #{tpu_custom_call.1} parent=1 // pred_check_branch
      %30 = sbr.rel (0) target = $region5
    $region4: #{tpu_custom_call.1} parent=1 // pred_region
      %s32 = ssub.s32 1024, 1024
      %33 = vsyncadd [#allocation3], %s32
      %s34 = sshll.u32 [#allocation2], 4
      %s35 = int_to_ptr.vmem [resolvable:$true] %s34
      %40 = dma.hbm_to_vmem [thread:$0]  %s0, 1024, %s35, [#allocation3], 64, 64, 4
    $region5: #{tpu_custom_call.1} parent=1 // pred_fallthru
      _
    // Predicated region
    $region6: #{tpu_custom_call.1} parent=1 // pred_check
      _
    $region7: #{tpu_custom_call.1} parent=1 // pred_check_branch
      %42 = sbr.rel (0) target = $region9
    $region8: #{tpu_custom_call.1} parent=1 // pred_region
      _
    $region9: #{tpu_custom_call.1} parent=1 // pred_fallthru
      _
    // Predicated region
    $region10: #{tpu_custom_call.1} parent=1 // pred_check
      _
    $region11: #{tpu_custom_call.1} parent=1 // pred_check_branch
      %44 = sbr.rel (0) target = $region13
    $region12: #{tpu_custom_call.1} parent=1 // pred_region
      %s46 = ssub.s32 1024, 1024
      %47 = vsyncadd [#allocation6], %s46
      %s48 = sshll.u32 [#allocation5], 4
      %s49 = int_to_ptr.vmem [resolvable:$true] %s48
      %54 = dma.hbm_to_vmem [thread:$0]  %s2, 1024, %s49, [#allocation6], 64, 64, 4
    $region13: #{tpu_custom_call.1} parent=1 // pred_fallthru
      _
    // Predicated region
    $region14: #{tpu_custom_call.1} parent=1 // pred_check
      _
    $region15: #{tpu_custom_call.1} parent=1 // pred_check_branch
      %56 = sbr.rel (0) target = $region17
    $region16: #{tpu_custom_call.1} parent=1 // pred_region
      %s58 = ssub.s32 1024, 1024
      %59 = vsyncadd [#allocation6], %s58
      %s60 = sshll.u32 [#allocation7], 4
      %s61 = int_to_ptr.vmem [resolvable:$true] %s60
      %66 = dma.hbm_to_vmem [thread:$0]  %s3, 1024, %s61, [#allocation6], 64, 64, 4
    $region17: #{tpu_custom_call.1} parent=1 // pred_fallthru
      _
    // Predicated region
    $region18: #{tpu_custom_call.1} parent=1 // pred_check
      _
    $region19: #{tpu_custom_call.1} parent=1 // pred_check_branch
      %68 = sbr.rel (0) target = $region21
    $region20: #{tpu_custom_call.1} parent=1 // pred_region
      _
    $region21: #{tpu_custom_call.1} parent=1 // pred_fallthru
      _
    // Predicated region
    $region22: #{tpu_custom_call.1} parent=1 // pred_check
      _
    $region23: #{tpu_custom_call.1} parent=1 // pred_check_branch
      %70 = sbr.rel (0) target = $region25
    $region24: #{tpu_custom_call.1} parent=1 // pred_region
      %s72 = ssub.s32 1024, 1024
      %73 = vsyncadd [#allocation9], %s72
      %s74 = sshll.u32 [#allocation8], 4
      %s75 = int_to_ptr.vmem [resolvable:$true] %s74
      %80 = dma.hbm_to_vmem [thread:$0]  %s5, 1024, %s75, [#allocation9], 64, 64, 4
    $region25: #{tpu_custom_call.1} parent=1 // pred_fallthru
      _
    // Predicated region
    $region26: #{tpu_custom_call.1} parent=1 // pred_check
      _
    $region27: #{tpu_custom_call.1} parent=1 // pred_check_branch
      %82 = sbr.rel (0) target = $region29
    $region28: #{tpu_custom_call.1} parent=1 // pred_region
      _
    $region29: #{tpu_custom_call.1} parent=1 // pred_fallthru
      _
    // Predicated region
    $region30: #{tpu_custom_call.1} parent=1 // pred_check
      _
    $region31: #{tpu_custom_call.1} parent=1 // pred_check_branch
      %84 = sbr.rel (0) target = $region33
    $region32: #{tpu_custom_call.1} parent=1 // pred_region
      _
    $region33: #{tpu_custom_call.1} parent=1 // pred_fallthru
      _
    // Predicated region
    $region34: #{tpu_custom_call.1} parent=1 // pred_check
      _
    $region35: #{tpu_custom_call.1} parent=1 // pred_check_branch
      %86 = sbr.rel (0) target = $region37
    $region36: #{tpu_custom_call.1} parent=1 // pred_region
      _
    $region37: #{tpu_custom_call.1} parent=1 // pred_fallthru
      _
    // Predicated region
    $region38: #{tpu_custom_call.1} parent=1 // pred_check
      _
    $region39: #{tpu_custom_call.1} parent=1 // pred_check_branch
      %88 = sbr.rel (0) target = $region41
    $region40: #{tpu_custom_call.1} parent=1 // pred_region
      _
    $region41: #{tpu_custom_call.1} parent=1 // pred_fallthru
      _
    // Predicated region
    $region42: #{tpu_custom_call.1} parent=1 // pred_check
      _
    $region43: #{tpu_custom_call.1} parent=1 // pred_check_branch
      %90 = sbr.rel (0) target = $region45
    $region44: #{tpu_custom_call.1} parent=1 // pred_region
      _
    $region45: #{tpu_custom_call.1} parent=1 // pred_fallthru
      _
    // Predicated region
    $region46: #{tpu_custom_call.1} parent=1 // pred_check
      _
    $region47: #{tpu_custom_call.1} parent=1 // pred_check_branch
      %92 = sbr.rel (0) target = $region49
    $region48: #{tpu_custom_call.1} parent=1 // pred_region
      %s94 = ssub.s32 1024, 1024
      %95 = vsyncadd [#allocation9], %s94
      %s96 = sshll.u32 [#allocation10], 4
      %s97 = int_to_ptr.vmem [resolvable:$true] %s96
      %102 = dma.hbm_to_vmem [thread:$0]  %s11, 1024, %s97, [#allocation9], 64, 64, 4
    $region49: #{tpu_custom_call.1} parent=1 // pred_fallthru
      _
    // Predicated region
    $region50: #{tpu_custom_call.1} parent=1 // pred_check
      _
    $region51: #{tpu_custom_call.1} parent=1 // pred_check_branch
      %104 = sbr.rel (0) target = $region53
    $region52: #{tpu_custom_call.1} parent=1 // pred_region
      _
    $region53: #{tpu_custom_call.1} parent=1 // pred_fallthru
      _
    // Predicated region
    $region54: #{tpu_custom_call.1} parent=1 // pred_check
      _
    $region55: #{tpu_custom_call.1} parent=1 // pred_check_branch
      %106 = sbr.rel (0) target = $region57
    $region56: #{tpu_custom_call.1} parent=1 // pred_region
      %s108 = ssub.s32 2048, 2048
      %109 = vsyncadd [#allocation12], %s108
      %s110 = sshll.u32 [#allocation11], 4
      %s111 = int_to_ptr.vmem [resolvable:$true] %s110
      %116 = dma.hbm_to_vmem [thread:$0]  %s13, 2048, %s111, [#allocation12], 64, 64, 4
    $region57: #{tpu_custom_call.1} parent=1 // pred_fallthru
      _
    // Predicated region
    $region58: #{tpu_custom_call.1} parent=1 // pred_check
      _
    $region59: #{tpu_custom_call.1} parent=1 // pred_check_branch
      %118 = sbr.rel (0) target = $region61
    $region60: #{tpu_custom_call.1} parent=1 // pred_region
      _
    $region61: #{tpu_custom_call.1} parent=1 // pred_fallthru
      _
    // Predicated region
    $region62: #{tpu_custom_call.1} parent=1 // pred_check
      _
    $region63: #{tpu_custom_call.1} parent=1 // pred_check_branch
      %120 = sbr.rel (0) target = $region65
    $region64: #{tpu_custom_call.1} parent=1 // pred_region
      _
    $region65: #{tpu_custom_call.1} parent=1 // pred_fallthru
      _
    // Predicated region
    $region66: #{tpu_custom_call.1} parent=1 // pred_check
      _
    $region67: #{tpu_custom_call.1} parent=1 // pred_check_branch
      %122 = sbr.rel (0) target = $region69
    $region68: #{tpu_custom_call.1} parent=1 // pred_region
      _
    $region69: #{tpu_custom_call.1} parent=1 // pred_fallthru
      _
    // Predicated region
    $region70: #{tpu_custom_call.1} parent=1 // pred_check
      _
    $region71: #{tpu_custom_call.1} parent=1 // pred_check_branch
      %124 = sbr.rel (0) target = $region73
    $region72: #{tpu_custom_call.1} parent=1 // pred_region
      _
    $region73: #{tpu_custom_call.1} parent=1 // pred_fallthru
      _
    // Predicated region
    $region74: #{tpu_custom_call.1} parent=1 // pred_check
      _
    $region75: #{tpu_custom_call.1} parent=1 // pred_check_branch
      %126 = sbr.rel (0) target = $region77
    $region76: #{tpu_custom_call.1} parent=1 // pred_region
      _
    $region77: #{tpu_custom_call.1} parent=1 // pred_fallthru
      _
    // Predicated region
    $region78: #{tpu_custom_call.1} parent=1 // pred_check
      _
    $region79: #{tpu_custom_call.1} parent=1 // pred_check_branch
      %128 = sbr.rel (0) target = $region81
    $region80: #{tpu_custom_call.1} parent=1 // pred_region
      %129 = dma.done [#allocation3], 1024
    $region81: #{tpu_custom_call.1} parent=1 // pred_fallthru
      _
    // Predicated region
    $region82: #{tpu_custom_call.1} parent=1 // pred_check
      _
    $region83: #{tpu_custom_call.1} parent=1 // pred_check_branch
      %131 = sbr.rel (0) target = $region85
    $region84: #{tpu_custom_call.1} parent=1 // pred_region
      %132 = dma.done [#allocation6], 1024
    $region85: #{tpu_custom_call.1} parent=1 // pred_fallthru
      _
    // Predicated region
    $region86: #{tpu_custom_call.1} parent=1 // pred_check
      _
    $region87: #{tpu_custom_call.1} parent=1 // pred_check_branch
      %134 = sbr.rel (0) target = $region89
    $region88: #{tpu_custom_call.1} parent=1 // pred_region
      %135 = dma.done [#allocation6], 1024
    $region89: #{tpu_custom_call.1} parent=1 // pred_fallthru
      _
    // Predicated region
    $region90: #{tpu_custom_call.1} parent=1 // pred_check
      _
    $region91: #{tpu_custom_call.1} parent=1 // pred_check_branch
      %137 = sbr.rel (0) target = $region93
    $region92: #{tpu_custom_call.1} parent=1 // pred_region
      %138 = dma.done [#allocation9], 1024
    $region93: #{tpu_custom_call.1} parent=1 // pred_fallthru
      _
    // Predicated region
    $region94: #{tpu_custom_call.1} parent=1 // pred_check
      _
    $region95: #{tpu_custom_call.1} parent=1 // pred_check_branch
      %140 = sbr.rel (0) target = $region97
    $region96: #{tpu_custom_call.1} parent=1 // pred_region
      %141 = dma.done [#allocation9], 1024
    $region97: #{tpu_custom_call.1} parent=1 // pred_fallthru
      _
    // Predicated region
    $region98: #{tpu_custom_call.1} parent=1 // pred_check
      _
    $region99: #{tpu_custom_call.1} parent=1 // pred_check_branch
      %143 = sbr.rel (0) target = $region101
    $region100: #{tpu_custom_call.1} parent=1 // pred_region
      %144 = dma.done [#allocation12], 2048
    $region101: #{tpu_custom_call.1} parent=1 // pred_fallthru
      _
    %v146 = vld [vmem:[#allocation5] sm:$0xf]
    %v147 = vld [vmem:[#allocation5 + $0x4] sm:$0xf]
    %v148 = vld [vmem:[#allocation5 + $0x8] sm:$0xf]
    %v149 = vld [vmem:[#allocation5 + $0xc] sm:$0xf]
    %v150 = vld [vmem:[#allocation5 + $0x10] sm:$0xf]
    %v151 = vld [vmem:[#allocation5 + $0x14] sm:$0xf]
    %v152 = vld [vmem:[#allocation5 + $0x18] sm:$0xf]
    %v153 = vld [vmem:[#allocation5 + $0x1c] sm:$0xf]
    %v154 = vld [vmem:[#allocation5 + $0x20] sm:$0xf]
    %v155 = vld [vmem:[#allocation5 + $0x24] sm:$0xf]
    %v156 = vld [vmem:[#allocation5 + $0x28] sm:$0xf]
    %v157 = vld [vmem:[#allocation5 + $0x2c] sm:$0xf]
    %v158 = vld [vmem:[#allocation5 + $0x30] sm:$0xf]
    %v159 = vld [vmem:[#allocation5 + $0x34] sm:$0xf]
    %v160 = vld [vmem:[#allocation5 + $0x38] sm:$0xf]
    %v161 = vld [vmem:[#allocation5 + $0x3c] sm:$0xf]
    %v162 = vld [vmem:[#allocation2] sm:$0xf]
    %v163 = vld [vmem:[#allocation2 + $0x4] sm:$0xf]
    %v164 = vld [vmem:[#allocation2 + $0x8] sm:$0xf]
    %v165 = vld [vmem:[#allocation2 + $0xc] sm:$0xf]
    %v166 = vld [vmem:[#allocation2 + $0x10] sm:$0xf]
    %v167 = vld [vmem:[#allocation2 + $0x14] sm:$0xf]
    %v168 = vld [vmem:[#allocation2 + $0x18] sm:$0xf]
    %v169 = vld [vmem:[#allocation2 + $0x1c] sm:$0xf]
    %v170 = vld [vmem:[#allocation2 + $0x20] sm:$0xf]
    %v171 = vld [vmem:[#allocation2 + $0x24] sm:$0xf]
    %v172 = vld [vmem:[#allocation2 + $0x28] sm:$0xf]
    %v173 = vld [vmem:[#allocation2 + $0x2c] sm:$0xf]
    %v174 = vld [vmem:[#allocation2 + $0x30] sm:$0xf]
    %v175 = vld [vmem:[#allocation2 + $0x34] sm:$0xf]
    %v176 = vld [vmem:[#allocation2 + $0x38] sm:$0xf]
    %v177 = vld [vmem:[#allocation2 + $0x3c] sm:$0xf]
    %v178 = vld [vmem:[%s1] sm:$0x1]
    %v180 = vlaneseq
    %v181 = vshrl.u32 %v180, 7
    %v182 = vsub.s32 0, %v181
    %v183 = vrot.slane %v178, %v182
    %v201 = vunpack.c.l.b16 %v146
    %v202 = vunpack.c.l.b16 %v147
    %v203 = vunpack.c.l.b16 %v148
    %v204 = vunpack.c.l.b16 %v149
    %v205 = vunpack.c.l.b16 %v150
    %v206 = vunpack.c.l.b16 %v151
    %v207 = vunpack.c.l.b16 %v152
    %v208 = vunpack.c.l.b16 %v153
    %v209 = vunpack.c.l.b16 %v154
    %v210 = vunpack.c.l.b16 %v155
    %v211 = vunpack.c.l.b16 %v156
    %v212 = vunpack.c.l.b16 %v157
    %v213 = vunpack.c.l.b16 %v158
    %v214 = vunpack.c.l.b16 %v159
    %v215 = vunpack.c.l.b16 %v160
    %v216 = vunpack.c.l.b16 %v161
    %v217 = vpack.c.b16 %v202, %v201
    %v218 = vpack.c.b16 %v204, %v203
    %v219 = vpack.c.b16 %v206, %v205
    %v220 = vpack.c.b16 %v208, %v207
    %v221 = vpack.c.b16 %v210, %v209
    %v222 = vpack.c.b16 %v212, %v211
    %v223 = vpack.c.b16 %v214, %v213
    %v224 = vpack.c.b16 %v216, %v215
    %v249 = vunpack.c.l.b16 %v162
    %v250 = vunpack.c.l.b16 %v163
    %v251 = vunpack.c.l.b16 %v164
    %v252 = vunpack.c.l.b16 %v165
    %v253 = vunpack.c.l.b16 %v166
    %v254 = vunpack.c.l.b16 %v167
    %v255 = vunpack.c.l.b16 %v168
    %v256 = vunpack.c.l.b16 %v169
    %v257 = vunpack.c.l.b16 %v170
    %v258 = vunpack.c.l.b16 %v171
    %v259 = vunpack.c.l.b16 %v172
    %v260 = vunpack.c.l.b16 %v173
    %v261 = vunpack.c.l.b16 %v174
    %v262 = vunpack.c.l.b16 %v175
    %v263 = vunpack.c.l.b16 %v176
    %v264 = vunpack.c.l.b16 %v177
    %v265 = vpack.c.b16 %v250, %v249
    %v266 = vpack.c.b16 %v252, %v251
    %v267 = vpack.c.b16 %v254, %v253
    %v268 = vpack.c.b16 %v256, %v255
    %v269 = vpack.c.b16 %v258, %v257
    %v270 = vpack.c.b16 %v260, %v259
    %v271 = vpack.c.b16 %v262, %v261
    %v272 = vpack.c.b16 %v264, %v263
    %281 = vmatprep.subr.bf16.mxu0 0
    %282 = vmatpush1.bf16.msra.mxu0 %v272
    %283 = vmatprep.subr.bf16.mxu0 0
    %284 = vmatpush1.bf16.msra.mxu0 %v271
    %285 = vmatprep.subr.bf16.mxu0 0
    %286 = vmatpush1.bf16.msra.mxu0 %v270
    %287 = vmatprep.subr.bf16.mxu0 0
    %288 = vmatpush1.bf16.msra.mxu0 %v269
    %289 = vmatprep.subr.bf16.mxu0 0
    %290 = vmatpush1.bf16.msra.mxu0 %v268
    %291 = vmatprep.subr.bf16.mxu0 0
    %292 = vmatpush1.bf16.msra.mxu0 %v267
    %293 = vmatprep.subr.bf16.mxu0 0
    %294 = vmatpush1.bf16.msra.mxu0 %v266
    %295 = vmatprep.subr.bf16.mxu0 0
    %296 = vmatpush1.bf16.msra.mxu0 %v265
    %297 = vmatprep.subr.bf16.mxu0 0
    %298 = vmatpush2.bf16.msra.mxu0 0
    %299 = vmatprep.subr.bf16.mxu0 0
    %300 = vmatpush2.bf16.msra.mxu0 0
    %301 = vmatprep.subr.bf16.mxu0 0
    %302 = vmatpush2.bf16.msra.mxu0 0
    %303 = vmatprep.subr.bf16.mxu0 0
    %304 = vmatpush2.bf16.msra.mxu0 0
    %305 = vmatprep.subr.bf16.mxu0 0
    %306 = vmatpush2.bf16.msra.mxu0 0
    %307 = vmatprep.subr.bf16.mxu0 0
    %308 = vmatpush2.bf16.msra.mxu0 0
    %309 = vmatprep.subr.bf16.mxu0 0
    %310 = vmatpush2.bf16.msra.mxu0 0
    %311 = vmatprep.subr.bf16.mxu0 0
    %312 = vmatpush2.bf16.msra.mxu0 0
    %313 = vmatprep.mubr.bf16.mxu0 0
    %314 = vmatmul.mubr.bf16.gmra.mxu0 %v217
    %v315 = vpop.f32.mrf.mxu0
    %v316 = vadd.f32 %v183, %v315
    %v317 = vpop.f32.mrf.mxu0
    %v318 = vpop.f32.mrf.mxu0
    %v319 = vadd.f32 %v183, %v318
    %v320 = vpop.f32.mrf.mxu0
    %321 = vmatprep.mubr.bf16.mxu0 0
    %322 = vmatmul.mubr.bf16.gmra.mxu0 %v218
    %v323 = vpop.f32.mrf.mxu0
    %v324 = vadd.f32 %v183, %v323
    %v325 = vpop.f32.mrf.mxu0
    %v326 = vpop.f32.mrf.mxu0
    %v327 = vadd.f32 %v183, %v326
    %v328 = vpop.f32.mrf.mxu0
    %329 = vmatprep.mubr.bf16.mxu0 0
    %330 = vmatmul.mubr.bf16.gmra.mxu0 %v219
    %v331 = vpop.f32.mrf.mxu0
    %v332 = vadd.f32 %v183, %v331
    %v333 = vpop.f32.mrf.mxu0
    %v334 = vpop.f32.mrf.mxu0
    %v335 = vadd.f32 %v183, %v334
    %v336 = vpop.f32.mrf.mxu0
    %337 = vmatprep.mubr.bf16.mxu0 0
    %338 = vmatmul.mubr.bf16.gmra.mxu0 %v220
    %v339 = vpop.f32.mrf.mxu0
    %v340 = vadd.f32 %v183, %v339
    %v341 = vpop.f32.mrf.mxu0
    %v342 = vpop.f32.mrf.mxu0
    %v343 = vadd.f32 %v183, %v342
    %v344 = vpop.f32.mrf.mxu0
    %345 = vmatprep.mubr.bf16.mxu0 0
    %346 = vmatmul.mubr.bf16.gmra.mxu0 %v221
    %v347 = vpop.f32.mrf.mxu0
    %v348 = vadd.f32 %v183, %v347
    %v349 = vpop.f32.mrf.mxu0
    %v350 = vpop.f32.mrf.mxu0
    %v351 = vadd.f32 %v183, %v350
    %v352 = vpop.f32.mrf.mxu0
    %353 = vmatprep.mubr.bf16.mxu0 0
    %354 = vmatmul.mubr.bf16.gmra.mxu0 %v222
    %v355 = vpop.f32.mrf.mxu0
    %v356 = vadd.f32 %v183, %v355
    %v357 = vpop.f32.mrf.mxu0
    %v358 = vpop.f32.mrf.mxu0
    %v359 = vadd.f32 %v183, %v358
    %v360 = vpop.f32.mrf.mxu0
    %361 = vmatprep.mubr.bf16.mxu0 0
    %362 = vmatmul.mubr.bf16.gmra.mxu0 %v223
    %v363 = vpop.f32.mrf.mxu0
    %v364 = vadd.f32 %v183, %v363
    %v365 = vpop.f32.mrf.mxu0
    %v366 = vpop.f32.mrf.mxu0
    %v367 = vadd.f32 %v183, %v366
    %v368 = vpop.f32.mrf.mxu0
    %369 = vmatprep.mubr.bf16.mxu0 0
    %370 = vmatmul.mubr.bf16.gmra.mxu0 %v224
    %v371 = vpop.f32.mrf.mxu0
    %v372 = vadd.f32 %v183, %v371
    %v373 = vpop.f32.mrf.mxu0
    %v374 = vpop.f32.mrf.mxu0
    %v375 = vadd.f32 %v183, %v374
    %v376 = vpop.f32.mrf.mxu0
    %377 = vdwg.mxu0
    %v378 = vld [vmem:[#allocation7] sm:$0xf]
    %v379 = vld [vmem:[#allocation7 + $0x4] sm:$0xf]
    %v380 = vld [vmem:[#allocation7 + $0x8] sm:$0xf]
    %v381 = vld [vmem:[#allocation7 + $0xc] sm:$0xf]
    %v382 = vld [vmem:[#allocation7 + $0x10] sm:$0xf]
    %v383 = vld [vmem:[#allocation7 + $0x14] sm:$0xf]
    %v384 = vld [vmem:[#allocation7 + $0x18] sm:$0xf]
    %v385 = vld [vmem:[#allocation7 + $0x1c] sm:$0xf]
    %v386 = vld [vmem:[#allocation7 + $0x20] sm:$0xf]
    %v387 = vld [vmem:[#allocation7 + $0x24] sm:$0xf]
    %v388 = vld [vmem:[#allocation7 + $0x28] sm:$0xf]
    %v389 = vld [vmem:[#allocation7 + $0x2c] sm:$0xf]
    %v390 = vld [vmem:[#allocation7 + $0x30] sm:$0xf]
    %v391 = vld [vmem:[#allocation7 + $0x34] sm:$0xf]
    %v392 = vld [vmem:[#allocation7 + $0x38] sm:$0xf]
    %v393 = vld [vmem:[#allocation7 + $0x3c] sm:$0xf]
    %v394 = vpack.c.bf16 %v319, %v316
    %v395 = vpack.c.bf16 %v327, %v324
    %v396 = vpack.c.bf16 %v335, %v332
    %v397 = vpack.c.bf16 %v343, %v340
    %v398 = vpack.c.bf16 %v351, %v348
    %v399 = vpack.c.bf16 %v359, %v356
    %v400 = vpack.c.bf16 %v367, %v364
    %v401 = vpack.c.bf16 %v375, %v372
    %v402 = vld [vmem:[#allocation8] sm:$0xf]
    %v403 = vld [vmem:[#allocation8 + $0x4] sm:$0xf]
    %v404 = vld [vmem:[#allocation8 + $0x8] sm:$0xf]
    %v405 = vld [vmem:[#allocation8 + $0xc] sm:$0xf]
    %v406 = vld [vmem:[#allocation8 + $0x10] sm:$0xf]
    %v407 = vld [vmem:[#allocation8 + $0x14] sm:$0xf]
    %v408 = vld [vmem:[#allocation8 + $0x18] sm:$0xf]
    %v409 = vld [vmem:[#allocation8 + $0x1c] sm:$0xf]
    %v410 = vld [vmem:[#allocation8 + $0x20] sm:$0xf]
    %v411 = vld [vmem:[#allocation8 + $0x24] sm:$0xf]
    %v412 = vld [vmem:[#allocation8 + $0x28] sm:$0xf]
    %v413 = vld [vmem:[#allocation8 + $0x2c] sm:$0xf]
    %v414 = vld [vmem:[#allocation8 + $0x30] sm:$0xf]
    %v415 = vld [vmem:[#allocation8 + $0x34] sm:$0xf]
    %v416 = vld [vmem:[#allocation8 + $0x38] sm:$0xf]
    %v417 = vld [vmem:[#allocation8 + $0x3c] sm:$0xf]
    %v418 = vld [vmem:[%s6] sm:$0x1]
    %v420 = vlaneseq
    %v421 = vshrl.u32 %v420, 7
    %v422 = vsub.s32 0, %v421
    %v423 = vrot.slane %v418, %v422
    %v441 = vunpack.c.l.b16 %v402
    %v442 = vunpack.c.l.b16 %v403
    %v443 = vunpack.c.l.b16 %v404
    %v444 = vunpack.c.l.b16 %v405
    %v445 = vunpack.c.l.b16 %v406
    %v446 = vunpack.c.l.b16 %v407
    %v447 = vunpack.c.l.b16 %v408
    %v448 = vunpack.c.l.b16 %v409
    %v449 = vunpack.c.l.b16 %v410
    %v450 = vunpack.c.l.b16 %v411
    %v451 = vunpack.c.l.b16 %v412
    %v452 = vunpack.c.l.b16 %v413
    %v453 = vunpack.c.l.b16 %v414
    %v454 = vunpack.c.l.b16 %v415
    %v455 = vunpack.c.l.b16 %v416
    %v456 = vunpack.c.l.b16 %v417
    %v457 = vpack.c.b16 %v442, %v441
    %v458 = vpack.c.b16 %v444, %v443
    %v459 = vpack.c.b16 %v446, %v445
    %v460 = vpack.c.b16 %v448, %v447
    %v461 = vpack.c.b16 %v450, %v449
    %v462 = vpack.c.b16 %v452, %v451
    %v463 = vpack.c.b16 %v454, %v453
    %v464 = vpack.c.b16 %v456, %v455
    %473 = vmatprep.subr.bf16.mxu0 0
    %474 = vmatpush1.bf16.msra.mxu0 %v464
    %475 = vmatprep.subr.bf16.mxu0 0
    %476 = vmatpush1.bf16.msra.mxu0 %v463
    %477 = vmatprep.subr.bf16.mxu0 0
    %478 = vmatpush1.bf16.msra.mxu0 %v462
    %479 = vmatprep.subr.bf16.mxu0 0
    %480 = vmatpush1.bf16.msra.mxu0 %v461
    %481 = vmatprep.subr.bf16.mxu0 0
    %482 = vmatpush1.bf16.msra.mxu0 %v460
    %483 = vmatprep.subr.bf16.mxu0 0
    %484 = vmatpush1.bf16.msra.mxu0 %v459
    %485 = vmatprep.subr.bf16.mxu0 0
    %486 = vmatpush1.bf16.msra.mxu0 %v458
    %487 = vmatprep.subr.bf16.mxu0 0
    %488 = vmatpush1.bf16.msra.mxu0 %v457
    %489 = vmatprep.subr.bf16.mxu0 0
    %490 = vmatpush2.bf16.msra.mxu0 0
    %491 = vmatprep.subr.bf16.mxu0 0
    %492 = vmatpush2.bf16.msra.mxu0 0
    %493 = vmatprep.subr.bf16.mxu0 0
    %494 = vmatpush2.bf16.msra.mxu0 0
    %495 = vmatprep.subr.bf16.mxu0 0
    %496 = vmatpush2.bf16.msra.mxu0 0
    %497 = vmatprep.subr.bf16.mxu0 0
    %498 = vmatpush2.bf16.msra.mxu0 0
    %499 = vmatprep.subr.bf16.mxu0 0
    %500 = vmatpush2.bf16.msra.mxu0 0
    %501 = vmatprep.subr.bf16.mxu0 0
    %502 = vmatpush2.bf16.msra.mxu0 0
    %503 = vmatprep.subr.bf16.mxu0 0
    %504 = vmatpush2.bf16.msra.mxu0 0
    %505 = vmatprep.mubr.bf16.mxu0 0
    %506 = vmatmul.mubr.bf16.gmra.mxu0 %v394
    %v507 = vpop.f32.mrf.mxu0
    %v508 = vadd.f32 %v423, %v507
    %v509 = vpop.f32.mrf.mxu0
    %v510 = vpop.f32.mrf.mxu0
    %v511 = vadd.f32 %v423, %v510
    %v512 = vpop.f32.mrf.mxu0
    %513 = vmatprep.mubr.bf16.mxu0 0
    %514 = vmatmul.mubr.bf16.gmra.mxu0 %v395
    %v515 = vpop.f32.mrf.mxu0
    %v516 = vadd.f32 %v423, %v515
    %v517 = vpop.f32.mrf.mxu0
    %v518 = vpop.f32.mrf.mxu0
    %v519 = vadd.f32 %v423, %v518
    %v520 = vpop.f32.mrf.mxu0
    %521 = vmatprep.mubr.bf16.mxu0 0
    %522 = vmatmul.mubr.bf16.gmra.mxu0 %v396
    %v523 = vpop.f32.mrf.mxu0
    %v524 = vadd.f32 %v423, %v523
    %v525 = vpop.f32.mrf.mxu0
    %v526 = vpop.f32.mrf.mxu0
    %v527 = vadd.f32 %v423, %v526
    %v528 = vpop.f32.mrf.mxu0
    %529 = vmatprep.mubr.bf16.mxu0 0
    %530 = vmatmul.mubr.bf16.gmra.mxu0 %v397
    %v531 = vpop.f32.mrf.mxu0
    %v532 = vadd.f32 %v423, %v531
    %v533 = vpop.f32.mrf.mxu0
    %v534 = vpop.f32.mrf.mxu0
    %v535 = vadd.f32 %v423, %v534
    %v536 = vpop.f32.mrf.mxu0
    %537 = vmatprep.mubr.bf16.mxu0 0
    %538 = vmatmul.mubr.bf16.gmra.mxu0 %v398
    %v539 = vpop.f32.mrf.mxu0
    %v540 = vadd.f32 %v423, %v539
    %v541 = vpop.f32.mrf.mxu0
    %v542 = vpop.f32.mrf.mxu0
    %v543 = vadd.f32 %v423, %v542
    %v544 = vpop.f32.mrf.mxu0
    %545 = vmatprep.mubr.bf16.mxu0 0
    %546 = vmatmul.mubr.bf16.gmra.mxu0 %v399
    %v547 = vpop.f32.mrf.mxu0
    %v548 = vadd.f32 %v423, %v547
    %v549 = vpop.f32.mrf.mxu0
    %v550 = vpop.f32.mrf.mxu0
    %v551 = vadd.f32 %v423, %v550
    %v552 = vpop.f32.mrf.mxu0
    %553 = vmatprep.mubr.bf16.mxu0 0
    %554 = vmatmul.mubr.bf16.gmra.mxu0 %v400
    %v555 = vpop.f32.mrf.mxu0
    %v556 = vadd.f32 %v423, %v555
    %v557 = vpop.f32.mrf.mxu0
    %v558 = vpop.f32.mrf.mxu0
    %v559 = vadd.f32 %v423, %v558
    %v560 = vpop.f32.mrf.mxu0
    %561 = vmatprep.mubr.bf16.mxu0 0
    %562 = vmatmul.mubr.bf16.gmra.mxu0 %v401
    %v563 = vpop.f32.mrf.mxu0
    %v564 = vadd.f32 %v423, %v563
    %v565 = vpop.f32.mrf.mxu0
    %v566 = vpop.f32.mrf.mxu0
    %v567 = vadd.f32 %v423, %v566
    %v568 = vpop.f32.mrf.mxu0
    %569 = vdwg.mxu0
    %v570 = vmax.f32 %v508, 0.0
    %v571 = vmax.f32 %v511, 0.0
    %v572 = vmax.f32 %v516, 0.0
    %v573 = vmax.f32 %v519, 0.0
    %v574 = vmax.f32 %v524, 0.0
    %v575 = vmax.f32 %v527, 0.0
    %v576 = vmax.f32 %v532, 0.0
    %v577 = vmax.f32 %v535, 0.0
    %v578 = vmax.f32 %v540, 0.0
    %v579 = vmax.f32 %v543, 0.0
    %v580 = vmax.f32 %v548, 0.0
    %v581 = vmax.f32 %v551, 0.0
    %v582 = vmax.f32 %v556, 0.0
    %v583 = vmax.f32 %v559, 0.0
    %v584 = vmax.f32 %v564, 0.0
    %v585 = vmax.f32 %v567, 0.0
    %v586 = vpack.c.bf16 %v571, %v570
    %v587 = vpack.c.bf16 %v573, %v572
    %v588 = vpack.c.bf16 %v575, %v574
    %v589 = vpack.c.bf16 %v577, %v576
    %v590 = vpack.c.bf16 %v579, %v578
    %v591 = vpack.c.bf16 %v581, %v580
    %v592 = vpack.c.bf16 %v583, %v582
    %v593 = vpack.c.bf16 %v585, %v584
    %v610 = vunpack.c.l.b16 %v378
    %v611 = vunpack.c.l.b16 %v379
    %v612 = vunpack.c.l.b16 %v380
    %v613 = vunpack.c.l.b16 %v381
    %v614 = vunpack.c.l.b16 %v382
    %v615 = vunpack.c.l.b16 %v383
    %v616 = vunpack.c.l.b16 %v384
    %v617 = vunpack.c.l.b16 %v385
    %v618 = vunpack.c.l.b16 %v386
    %v619 = vunpack.c.l.b16 %v387
    %v620 = vunpack.c.l.b16 %v388
    %v621 = vunpack.c.l.b16 %v389
    %v622 = vunpack.c.l.b16 %v390
    %v623 = vunpack.c.l.b16 %v391
    %v624 = vunpack.c.l.b16 %v392
    %v625 = vunpack.c.l.b16 %v393
    %v626 = vpack.c.b16 %v611, %v610
    %v627 = vpack.c.b16 %v613, %v612
    %v628 = vpack.c.b16 %v615, %v614
    %v629 = vpack.c.b16 %v617, %v616
    %v630 = vpack.c.b16 %v619, %v618
    %v631 = vpack.c.b16 %v621, %v620
    %v632 = vpack.c.b16 %v623, %v622
    %v633 = vpack.c.b16 %v625, %v624
    %642 = vmatprep.subr.bf16.mxu0 0
    %643 = vmatpush1.bf16.msra.mxu0 %v593
    %644 = vmatprep.subr.bf16.mxu0 0
    %645 = vmatpush1.bf16.msra.mxu0 %v592
    %646 = vmatprep.subr.bf16.mxu0 0
    %647 = vmatpush1.bf16.msra.mxu0 %v591
    %648 = vmatprep.subr.bf16.mxu0 0
    %649 = vmatpush1.bf16.msra.mxu0 %v590
    %650 = vmatprep.subr.bf16.mxu0 0
    %651 = vmatpush1.bf16.msra.mxu0 %v589
    %652 = vmatprep.subr.bf16.mxu0 0
    %653 = vmatpush1.bf16.msra.mxu0 %v588
    %654 = vmatprep.subr.bf16.mxu0 0
    %655 = vmatpush1.bf16.msra.mxu0 %v587
    %656 = vmatprep.subr.bf16.mxu0 0
    %657 = vmatpush1.bf16.msra.mxu0 %v586
    %658 = vmatprep.subr.bf16.mxu0 0
    %659 = vmatpush2.bf16.msra.mxu0 0
    %660 = vmatprep.subr.bf16.mxu0 0
    %661 = vmatpush2.bf16.msra.mxu0 0
    %662 = vmatprep.subr.bf16.mxu0 0
    %663 = vmatpush2.bf16.msra.mxu0 0
    %664 = vmatprep.subr.bf16.mxu0 0
    %665 = vmatpush2.bf16.msra.mxu0 0
    %666 = vmatprep.subr.bf16.mxu0 0
    %667 = vmatpush2.bf16.msra.mxu0 0
    %668 = vmatprep.subr.bf16.mxu0 0
    %669 = vmatpush2.bf16.msra.mxu0 0
    %670 = vmatprep.subr.bf16.mxu0 0
    %671 = vmatpush2.bf16.msra.mxu0 0
    %672 = vmatprep.subr.bf16.mxu0 0
    %673 = vmatpush2.bf16.msra.mxu0 0
    %674 = vmatprep.mubr.bf16.mxu0 0
    %675 = vmatmul.mubr.bf16.gmra.mxu0 %v626
    %v676 = vpop.f32.mrf.mxu0
    %v677 = vadd.f32 0.0, %v676
    %v678 = vpop.f32.mrf.mxu0
    %v679 = vpop.f32.mrf.mxu0
    %v680 = vadd.f32 0.0, %v679
    %v681 = vpop.f32.mrf.mxu0
    %682 = vmatprep.mubr.bf16.mxu0 0
    %683 = vmatmul.mubr.bf16.gmra.mxu0 %v627
    %v684 = vpop.f32.mrf.mxu0
    %v685 = vadd.f32 0.0, %v684
    %v686 = vpop.f32.mrf.mxu0
    %v687 = vpop.f32.mrf.mxu0
    %v688 = vadd.f32 0.0, %v687
    %v689 = vpop.f32.mrf.mxu0
    %690 = vmatprep.mubr.bf16.mxu0 0
    %691 = vmatmul.mubr.bf16.gmra.mxu0 %v628
    %v692 = vpop.f32.mrf.mxu0
    %v693 = vadd.f32 0.0, %v692
    %v694 = vpop.f32.mrf.mxu0
    %v695 = vpop.f32.mrf.mxu0
    %v696 = vadd.f32 0.0, %v695
    %v697 = vpop.f32.mrf.mxu0
    %698 = vmatprep.mubr.bf16.mxu0 0
    %699 = vmatmul.mubr.bf16.gmra.mxu0 %v629
    %v700 = vpop.f32.mrf.mxu0
    %v701 = vadd.f32 0.0, %v700
    %v702 = vpop.f32.mrf.mxu0
    %v703 = vpop.f32.mrf.mxu0
    %v704 = vadd.f32 0.0, %v703
    %v705 = vpop.f32.mrf.mxu0
    %706 = vmatprep.mubr.bf16.mxu0 0
    %707 = vmatmul.mubr.bf16.gmra.mxu0 %v630
    %v708 = vpop.f32.mrf.mxu0
    %v709 = vadd.f32 0.0, %v708
    %v710 = vpop.f32.mrf.mxu0
    %v711 = vpop.f32.mrf.mxu0
    %v712 = vadd.f32 0.0, %v711
    %v713 = vpop.f32.mrf.mxu0
    %714 = vmatprep.mubr.bf16.mxu0 0
    %715 = vmatmul.mubr.bf16.gmra.mxu0 %v631
    %v716 = vpop.f32.mrf.mxu0
    %v717 = vadd.f32 0.0, %v716
    %v718 = vpop.f32.mrf.mxu0
    %v719 = vpop.f32.mrf.mxu0
    %v720 = vadd.f32 0.0, %v719
    %v721 = vpop.f32.mrf.mxu0
    %722 = vmatprep.mubr.bf16.mxu0 0
    %723 = vmatmul.mubr.bf16.gmra.mxu0 %v632
    %v724 = vpop.f32.mrf.mxu0
    %v725 = vadd.f32 0.0, %v724
    %v726 = vpop.f32.mrf.mxu0
    %v727 = vpop.f32.mrf.mxu0
    %v728 = vadd.f32 0.0, %v727
    %v729 = vpop.f32.mrf.mxu0
    %730 = vmatprep.mubr.bf16.mxu0 0
    %731 = vmatmul.mubr.bf16.gmra.mxu0 %v633
    %v732 = vpop.f32.mrf.mxu0
    %v733 = vadd.f32 0.0, %v732
    %v734 = vpop.f32.mrf.mxu0
    %v735 = vpop.f32.mrf.mxu0
    %v736 = vadd.f32 0.0, %v735
    %v737 = vpop.f32.mrf.mxu0
    %738 = vdwg.mxu0
    %v739 = vld [vmem:[%s4] sm:$0xff]
    %v740 = vld [vmem:[%s4 + $0x8] sm:$0xff]
    %v741 = vld [vmem:[%s4 + $0x10] sm:$0xff]
    %v742 = vld [vmem:[%s4 + $0x18] sm:$0xff]
    %v743 = vld [vmem:[%s4 + $0x20] sm:$0xff]
    %v744 = vld [vmem:[%s4 + $0x28] sm:$0xff]
    %v745 = vld [vmem:[%s4 + $0x30] sm:$0xff]
    %v746 = vld [vmem:[%s4 + $0x38] sm:$0xff]
    %v747 = vld [vmem:[%s4 + $0x40] sm:$0xff]
    %v748 = vld [vmem:[%s4 + $0x48] sm:$0xff]
    %v749 = vld [vmem:[%s4 + $0x50] sm:$0xff]
    %v750 = vld [vmem:[%s4 + $0x58] sm:$0xff]
    %v751 = vld [vmem:[%s4 + $0x60] sm:$0xff]
    %v752 = vld [vmem:[%s4 + $0x68] sm:$0xff]
    %v753 = vld [vmem:[%s4 + $0x70] sm:$0xff]
    %v754 = vld [vmem:[%s4 + $0x78] sm:$0xff]
    %756 = vset.pattern.permute.xlu0 0
    %757 = vperm.xlu0 %756, %v739
    %v758 = vpop.permute.xlu0 %757
    %761 = vset.pattern.permute.xlu0 0
    %762 = vperm.xlu0 %761, %v740
    %v763 = vpop.permute.xlu0 %762
    %766 = vset.pattern.permute.xlu0 0
    %767 = vperm.xlu0 %766, %v741
    %v768 = vpop.permute.xlu0 %767
    %771 = vset.pattern.permute.xlu0 0
    %772 = vperm.xlu0 %771, %v742
    %v773 = vpop.permute.xlu0 %772
    %776 = vset.pattern.permute.xlu0 0
    %777 = vperm.xlu0 %776, %v743
    %v778 = vpop.permute.xlu0 %777
    %781 = vset.pattern.permute.xlu0 0
    %782 = vperm.xlu0 %781, %v744
    %v783 = vpop.permute.xlu0 %782
    %786 = vset.pattern.permute.xlu0 0
    %787 = vperm.xlu0 %786, %v745
    %v788 = vpop.permute.xlu0 %787
    %791 = vset.pattern.permute.xlu0 0
    %792 = vperm.xlu0 %791, %v746
    %v793 = vpop.permute.xlu0 %792
    %796 = vset.pattern.permute.xlu0 0
    %797 = vperm.xlu0 %796, %v747
    %v798 = vpop.permute.xlu0 %797
    %801 = vset.pattern.permute.xlu0 0
    %802 = vperm.xlu0 %801, %v748
    %v803 = vpop.permute.xlu0 %802
    %806 = vset.pattern.permute.xlu0 0
    %807 = vperm.xlu0 %806, %v749
    %v808 = vpop.permute.xlu0 %807
    %811 = vset.pattern.permute.xlu0 0
    %812 = vperm.xlu0 %811, %v750
    %v813 = vpop.permute.xlu0 %812
    %816 = vset.pattern.permute.xlu0 0
    %817 = vperm.xlu0 %816, %v751
    %v818 = vpop.permute.xlu0 %817
    %821 = vset.pattern.permute.xlu0 0
    %822 = vperm.xlu0 %821, %v752
    %v823 = vpop.permute.xlu0 %822
    %826 = vset.pattern.permute.xlu0 0
    %827 = vperm.xlu0 %826, %v753
    %v828 = vpop.permute.xlu0 %827
    %831 = vset.pattern.permute.xlu0 0
    %832 = vperm.xlu0 %831, %v754
    %v833 = vpop.permute.xlu0 %832
    %v835 = vmul.f32 %v677, %v758
    %v836 = vmul.f32 %v680, %v763
    %v837 = vmul.f32 %v685, %v768
    %v838 = vmul.f32 %v688, %v773
    %v839 = vmul.f32 %v693, %v778
    %v840 = vmul.f32 %v696, %v783
    %v841 = vmul.f32 %v701, %v788
    %v842 = vmul.f32 %v704, %v793
    %v843 = vmul.f32 %v709, %v798
    %v844 = vmul.f32 %v712, %v803
    %v845 = vmul.f32 %v717, %v808
    %v846 = vmul.f32 %v720, %v813
    %v847 = vmul.f32 %v725, %v818
    %v848 = vmul.f32 %v728, %v823
    %v849 = vmul.f32 %v733, %v828
    %v850 = vmul.f32 %v736, %v833
    %v851 = vpack.c.bf16 %v836, %v835
    %v852 = vpack.c.bf16 %v838, %v837
    %v853 = vpack.c.bf16 %v840, %v839
    %v854 = vpack.c.bf16 %v842, %v841
    %v855 = vpack.c.bf16 %v844, %v843
    %v856 = vpack.c.bf16 %v846, %v845
    %v857 = vpack.c.bf16 %v848, %v847
    %v858 = vpack.c.bf16 %v850, %v849
    %v859 = vld [vmem:[%s7] sm:$0xf]
    %v860 = vld [vmem:[%s7 + $0x4] sm:$0xf]
    %v861 = vld [vmem:[%s7 + $0x8] sm:$0xf]
    %v862 = vld [vmem:[%s7 + $0xc] sm:$0xf]
    %v863 = vld [vmem:[%s7 + $0x10] sm:$0xf]
    %v864 = vld [vmem:[%s7 + $0x14] sm:$0xf]
    %v865 = vld [vmem:[%s7 + $0x18] sm:$0xf]
    %v866 = vld [vmem:[%s7 + $0x1c] sm:$0xf]
    %v867 = vld [vmem:[%s7 + $0x20] sm:$0xf]
    %v868 = vld [vmem:[%s7 + $0x24] sm:$0xf]
    %v869 = vld [vmem:[%s7 + $0x28] sm:$0xf]
    %v870 = vld [vmem:[%s7 + $0x2c] sm:$0xf]
    %v871 = vld [vmem:[%s7 + $0x30] sm:$0xf]
    %v872 = vld [vmem:[%s7 + $0x34] sm:$0xf]
    %v873 = vld [vmem:[%s7 + $0x38] sm:$0xf]
    %v874 = vld [vmem:[%s7 + $0x3c] sm:$0xf]
    %v875 = vld [vmem:[%s7 + $0x40] sm:$0xf]
    %v876 = vld [vmem:[%s7 + $0x44] sm:$0xf]
    %v877 = vld [vmem:[%s7 + $0x48] sm:$0xf]
    %v878 = vld [vmem:[%s7 + $0x4c] sm:$0xf]
    %v879 = vld [vmem:[%s7 + $0x50] sm:$0xf]
    %v880 = vld [vmem:[%s7 + $0x54] sm:$0xf]
    %v881 = vld [vmem:[%s7 + $0x58] sm:$0xf]
    %v882 = vld [vmem:[%s7 + $0x5c] sm:$0xf]
    %v883 = vld [vmem:[%s7 + $0x60] sm:$0xf]
    %v884 = vld [vmem:[%s7 + $0x64] sm:$0xf]
    %v885 = vld [vmem:[%s7 + $0x68] sm:$0xf]
    %v886 = vld [vmem:[%s7 + $0x6c] sm:$0xf]
    %v887 = vld [vmem:[%s7 + $0x70] sm:$0xf]
    %v888 = vld [vmem:[%s7 + $0x74] sm:$0xf]
    %v889 = vld [vmem:[%s7 + $0x78] sm:$0xf]
    %v890 = vld [vmem:[%s7 + $0x7c] sm:$0xf]
    %v891 = vld [vmem:[%s8] sm:$0x1]
    %v893 = vlaneseq
    %v894 = vshrl.u32 %v893, 7
    %v895 = vsub.s32 0, %v894
    %v896 = vrot.slane %v891, %v895
    %v930 = vunpack.c.l.b16 %v859
    %v931 = vunpack.c.l.b16 %v860
    %v932 = vunpack.c.l.b16 %v861
    %v933 = vunpack.c.l.b16 %v862
    %v934 = vunpack.c.l.b16 %v863
    %v935 = vunpack.c.l.b16 %v864
    %v936 = vunpack.c.l.b16 %v865
    %v937 = vunpack.c.l.b16 %v866
    %v938 = vunpack.c.l.b16 %v867
    %v939 = vunpack.c.l.b16 %v868
    %v940 = vunpack.c.l.b16 %v869
    %v941 = vunpack.c.l.b16 %v870
    %v942 = vunpack.c.l.b16 %v871
    %v943 = vunpack.c.l.b16 %v872
    %v944 = vunpack.c.l.b16 %v873
    %v945 = vunpack.c.l.b16 %v874
    %v946 = vunpack.c.l.b16 %v875
    %v947 = vunpack.c.l.b16 %v876
    %v948 = vunpack.c.l.b16 %v877
    %v949 = vunpack.c.l.b16 %v878
    %v950 = vunpack.c.l.b16 %v879
    %v951 = vunpack.c.l.b16 %v880
    %v952 = vunpack.c.l.b16 %v881
    %v953 = vunpack.c.l.b16 %v882
    %v954 = vunpack.c.l.b16 %v883
    %v955 = vunpack.c.l.b16 %v884
    %v956 = vunpack.c.l.b16 %v885
    %v957 = vunpack.c.l.b16 %v886
    %v958 = vunpack.c.l.b16 %v887
    %v959 = vunpack.c.l.b16 %v888
    %v960 = vunpack.c.l.b16 %v889
    %v961 = vunpack.c.l.b16 %v890
    %v962 = vpack.c.b16 %v931, %v930
    %v963 = vpack.c.b16 %v933, %v932
    %v964 = vpack.c.b16 %v935, %v934
    %v965 = vpack.c.b16 %v937, %v936
    %v966 = vpack.c.b16 %v939, %v938
    %v967 = vpack.c.b16 %v941, %v940
    %v968 = vpack.c.b16 %v943, %v942
    %v969 = vpack.c.b16 %v945, %v944
    %v970 = vpack.c.b16 %v947, %v946
    %v971 = vpack.c.b16 %v949, %v948
    %v972 = vpack.c.b16 %v951, %v950
    %v973 = vpack.c.b16 %v953, %v952
    %v974 = vpack.c.b16 %v955, %v954
    %v975 = vpack.c.b16 %v957, %v956
    %v976 = vpack.c.b16 %v959, %v958
    %v977 = vpack.c.b16 %v961, %v960
    %994 = vmatprep.subr.bf16.mxu0 0
    %995 = vmatpush1.bf16.msra.mxu0 %v969
    %996 = vmatprep.subr.bf16.mxu0 0
    %997 = vmatpush1.bf16.msra.mxu0 %v968
    %998 = vmatprep.subr.bf16.mxu0 0
    %999 = vmatpush1.bf16.msra.mxu0 %v967
    %1000 = vmatprep.subr.bf16.mxu0 0
    %1001 = vmatpush1.bf16.msra.mxu0 %v966
    %1002 = vmatprep.subr.bf16.mxu0 0
    %1003 = vmatpush1.bf16.msra.mxu0 %v965
    %1004 = vmatprep.subr.bf16.mxu0 0
    %1005 = vmatpush1.bf16.msra.mxu0 %v964
    %1006 = vmatprep.subr.bf16.mxu0 0
    %1007 = vmatpush1.bf16.msra.mxu0 %v963
    %1008 = vmatprep.subr.bf16.mxu0 0
    %1009 = vmatpush1.bf16.msra.mxu0 %v962
    %1010 = vmatprep.subr.bf16.mxu0 0
    %1011 = vmatpush2.bf16.msra.mxu0 %v977
    %1012 = vmatprep.subr.bf16.mxu0 0
    %1013 = vmatpush2.bf16.msra.mxu0 %v976
    %1014 = vmatprep.subr.bf16.mxu0 0
    %1015 = vmatpush2.bf16.msra.mxu0 %v975
    %1016 = vmatprep.subr.bf16.mxu0 0
    %1017 = vmatpush2.bf16.msra.mxu0 %v974
    %1018 = vmatprep.subr.bf16.mxu0 0
    %1019 = vmatpush2.bf16.msra.mxu0 %v973
    %1020 = vmatprep.subr.bf16.mxu0 0
    %1021 = vmatpush2.bf16.msra.mxu0 %v972
    %1022 = vmatprep.subr.bf16.mxu0 0
    %1023 = vmatpush2.bf16.msra.mxu0 %v971
    %1024 = vmatprep.subr.bf16.mxu0 0
    %1025 = vmatpush2.bf16.msra.mxu0 %v970
    %1026 = vmatprep.mubr.bf16.mxu0 %v394
    %1027 = vmatmul.mubr.bf16.gmra.mxu0 %v851
    %v1028 = vpop.f32.mrf.mxu0
    %v1029 = vadd.f32 %v896, %v1028
    %v1030 = vpop.f32.mrf.mxu0
    %v1031 = vpop.f32.mrf.mxu0
    %v1032 = vadd.f32 %v896, %v1031
    %v1033 = vpop.f32.mrf.mxu0
    %1034 = vmatprep.mubr.bf16.mxu0 %v395
    %1035 = vmatmul.mubr.bf16.gmra.mxu0 %v852
    %v1036 = vpop.f32.mrf.mxu0
    %v1037 = vadd.f32 %v896, %v1036
    %v1038 = vpop.f32.mrf.mxu0
    %v1039 = vpop.f32.mrf.mxu0
    %v1040 = vadd.f32 %v896, %v1039
    %v1041 = vpop.f32.mrf.mxu0
    %1042 = vmatprep.mubr.bf16.mxu0 %v396
    %1043 = vmatmul.mubr.bf16.gmra.mxu0 %v853
    %v1044 = vpop.f32.mrf.mxu0
    %v1045 = vadd.f32 %v896, %v1044
    %v1046 = vpop.f32.mrf.mxu0
    %v1047 = vpop.f32.mrf.mxu0
    %v1048 = vadd.f32 %v896, %v1047
    %v1049 = vpop.f32.mrf.mxu0
    %1050 = vmatprep.mubr.bf16.mxu0 %v397
    %1051 = vmatmul.mubr.bf16.gmra.mxu0 %v854
    %v1052 = vpop.f32.mrf.mxu0
    %v1053 = vadd.f32 %v896, %v1052
    %v1054 = vpop.f32.mrf.mxu0
    %v1055 = vpop.f32.mrf.mxu0
    %v1056 = vadd.f32 %v896, %v1055
    %v1057 = vpop.f32.mrf.mxu0
    %1058 = vmatprep.mubr.bf16.mxu0 %v398
    %1059 = vmatmul.mubr.bf16.gmra.mxu0 %v855
    %v1060 = vpop.f32.mrf.mxu0
    %v1061 = vadd.f32 %v896, %v1060
    %v1062 = vpop.f32.mrf.mxu0
    %v1063 = vpop.f32.mrf.mxu0
    %v1064 = vadd.f32 %v896, %v1063
    %v1065 = vpop.f32.mrf.mxu0
    %1066 = vmatprep.mubr.bf16.mxu0 %v399
    %1067 = vmatmul.mubr.bf16.gmra.mxu0 %v856
    %v1068 = vpop.f32.mrf.mxu0
    %v1069 = vadd.f32 %v896, %v1068
    %v1070 = vpop.f32.mrf.mxu0
    %v1071 = vpop.f32.mrf.mxu0
    %v1072 = vadd.f32 %v896, %v1071
    %v1073 = vpop.f32.mrf.mxu0
    %1074 = vmatprep.mubr.bf16.mxu0 %v400
    %1075 = vmatmul.mubr.bf16.gmra.mxu0 %v857
    %v1076 = vpop.f32.mrf.mxu0
    %v1077 = vadd.f32 %v896, %v1076
    %v1078 = vpop.f32.mrf.mxu0
    %v1079 = vpop.f32.mrf.mxu0
    %v1080 = vadd.f32 %v896, %v1079
    %v1081 = vpop.f32.mrf.mxu0
    %1082 = vmatprep.mubr.bf16.mxu0 %v401
    %1083 = vmatmul.mubr.bf16.gmra.mxu0 %v858
    %v1084 = vpop.f32.mrf.mxu0
    %v1085 = vadd.f32 %v896, %v1084
    %v1086 = vpop.f32.mrf.mxu0
    %v1087 = vpop.f32.mrf.mxu0
    %v1088 = vadd.f32 %v896, %v1087
    %v1089 = vpop.f32.mrf.mxu0
    %1090 = vdwg.mxu0
    %v1091 = vmax.f32 %v1029, 0.0
    %v1092 = vmax.f32 %v1032, 0.0
    %v1093 = vmax.f32 %v1037, 0.0
    %v1094 = vmax.f32 %v1040, 0.0
    %v1095 = vmax.f32 %v1045, 0.0
    %v1096 = vmax.f32 %v1048, 0.0
    %v1097 = vmax.f32 %v1053, 0.0
    %v1098 = vmax.f32 %v1056, 0.0
    %v1099 = vmax.f32 %v1061, 0.0
    %v1100 = vmax.f32 %v1064, 0.0
    %v1101 = vmax.f32 %v1069, 0.0
    %v1102 = vmax.f32 %v1072, 0.0
    %v1103 = vmax.f32 %v1077, 0.0
    %v1104 = vmax.f32 %v1080, 0.0
    %v1105 = vmax.f32 %v1085, 0.0
    %v1106 = vmax.f32 %v1088, 0.0
    %v1107 = vmul.f32 %v1091, %v1091
    %v1108 = vmul.f32 %v1092, %v1092
    %v1109 = vmul.f32 %v1093, %v1093
    %v1110 = vmul.f32 %v1094, %v1094
    %v1111 = vmul.f32 %v1095, %v1095
    %v1112 = vmul.f32 %v1096, %v1096
    %v1113 = vmul.f32 %v1097, %v1097
    %v1114 = vmul.f32 %v1098, %v1098
    %v1115 = vmul.f32 %v1099, %v1099
    %v1116 = vmul.f32 %v1100, %v1100
    %v1117 = vmul.f32 %v1101, %v1101
    %v1118 = vmul.f32 %v1102, %v1102
    %v1119 = vmul.f32 %v1103, %v1103
    %v1120 = vmul.f32 %v1104, %v1104
    %v1121 = vmul.f32 %v1105, %v1105
    %v1122 = vmul.f32 %v1106, %v1106
    %1123 = vadd.xlane.f32.xlu0 %v1107
    %v1124 = vpop.xlane.xlu0 %1123
    %1125 = vadd.xlane.f32.xlu0 %v1108
    %v1126 = vpop.xlane.xlu0 %1125
    %1127 = vadd.xlane.f32.xlu0 %v1109
    %v1128 = vpop.xlane.xlu0 %1127
    %1129 = vadd.xlane.f32.xlu0 %v1110
    %v1130 = vpop.xlane.xlu0 %1129
    %1131 = vadd.xlane.f32.xlu0 %v1111
    %v1132 = vpop.xlane.xlu0 %1131
    %1133 = vadd.xlane.f32.xlu0 %v1112
    %v1134 = vpop.xlane.xlu0 %1133
    %1135 = vadd.xlane.f32.xlu0 %v1113
    %v1136 = vpop.xlane.xlu0 %1135
    %1137 = vadd.xlane.f32.xlu0 %v1114
    %v1138 = vpop.xlane.xlu0 %1137
    %1139 = vadd.xlane.f32.xlu0 %v1115
    %v1140 = vpop.xlane.xlu0 %1139
    %1141 = vadd.xlane.f32.xlu0 %v1116
    %v1142 = vpop.xlane.xlu0 %1141
    %1143 = vadd.xlane.f32.xlu0 %v1117
    %v1144 = vpop.xlane.xlu0 %1143
    %1145 = vadd.xlane.f32.xlu0 %v1118
    %v1146 = vpop.xlane.xlu0 %1145
    %1147 = vadd.xlane.f32.xlu0 %v1119
    %v1148 = vpop.xlane.xlu0 %1147
    %1149 = vadd.xlane.f32.xlu0 %v1120
    %v1150 = vpop.xlane.xlu0 %1149
    %1151 = vadd.xlane.f32.xlu0 %v1121
    %v1152 = vpop.xlane.xlu0 %1151
    %1153 = vadd.xlane.f32.xlu0 %v1122
    %v1154 = vpop.xlane.xlu0 %1153
    %vm1155 = vcmp.eq.f32.partialorder %v1124, 0.0
    %vm1156 = vcmp.eq.f32.partialorder %v1126, 0.0
    %vm1157 = vcmp.eq.f32.partialorder %v1128, 0.0
    %vm1158 = vcmp.eq.f32.partialorder %v1130, 0.0
    %vm1159 = vcmp.eq.f32.partialorder %v1132, 0.0
    %vm1160 = vcmp.eq.f32.partialorder %v1134, 0.0
    %vm1161 = vcmp.eq.f32.partialorder %v1136, 0.0
    %vm1162 = vcmp.eq.f32.partialorder %v1138, 0.0
    %vm1163 = vcmp.eq.f32.partialorder %v1140, 0.0
    %vm1164 = vcmp.eq.f32.partialorder %v1142, 0.0
    %vm1165 = vcmp.eq.f32.partialorder %v1144, 0.0
    %vm1166 = vcmp.eq.f32.partialorder %v1146, 0.0
    %vm1167 = vcmp.eq.f32.partialorder %v1148, 0.0
    %vm1168 = vcmp.eq.f32.partialorder %v1150, 0.0
    %vm1169 = vcmp.eq.f32.partialorder %v1152, 0.0
    %vm1170 = vcmp.eq.f32.partialorder %v1154, 0.0
    %v1171 = vrsqrt.pop %v1124
    %v1172 = vrsqrt.pop %v1126
    %v1173 = vrsqrt.pop %v1128
    %v1174 = vrsqrt.pop %v1130
    %v1175 = vrsqrt.pop %v1132
    %v1176 = vrsqrt.pop %v1134
    %v1177 = vrsqrt.pop %v1136
    %v1178 = vrsqrt.pop %v1138
    %v1179 = vrsqrt.pop %v1140
    %v1180 = vrsqrt.pop %v1142
    %v1181 = vrsqrt.pop %v1144
    %v1182 = vrsqrt.pop %v1146
    %v1183 = vrsqrt.pop %v1148
    %v1184 = vrsqrt.pop %v1150
    %v1185 = vrsqrt.pop %v1152
    %v1186 = vrsqrt.pop %v1154
    %v1187 = vsel %vm1155, 1.0, %v1171
    %v1188 = vsel %vm1156, 1.0, %v1172
    %v1189 = vsel %vm1157, 1.0, %v1173
    %v1190 = vsel %vm1158, 1.0, %v1174
    %v1191 = vsel %vm1159, 1.0, %v1175
    %v1192 = vsel %vm1160, 1.0, %v1176
    %v1193 = vsel %vm1161, 1.0, %v1177
    %v1194 = vsel %vm1162, 1.0, %v1178
    %v1195 = vsel %vm1163, 1.0, %v1179
    %v1196 = vsel %vm1164, 1.0, %v1180
    %v1197 = vsel %vm1165, 1.0, %v1181
    %v1198 = vsel %vm1166, 1.0, %v1182
    %v1199 = vsel %vm1167, 1.0, %v1183
    %v1200 = vsel %vm1168, 1.0, %v1184
    %v1201 = vsel %vm1169, 1.0, %v1185
    %v1202 = vsel %vm1170, 1.0, %v1186
    %v1203 = vmul.f32 %v1091, %v1187
    %v1204 = vmul.f32 %v1092, %v1188
    %v1205 = vmul.f32 %v1093, %v1189
    %v1206 = vmul.f32 %v1094, %v1190
    %v1207 = vmul.f32 %v1095, %v1191
    %v1208 = vmul.f32 %v1096, %v1192
    %v1209 = vmul.f32 %v1097, %v1193
    %v1210 = vmul.f32 %v1098, %v1194
    %v1211 = vmul.f32 %v1099, %v1195
    %v1212 = vmul.f32 %v1100, %v1196
    %v1213 = vmul.f32 %v1101, %v1197
    %v1214 = vmul.f32 %v1102, %v1198
    %v1215 = vmul.f32 %v1103, %v1199
    %v1216 = vmul.f32 %v1104, %v1200
    %v1217 = vmul.f32 %v1105, %v1201
    %v1218 = vmul.f32 %v1106, %v1202
    %v1219 = vld [vmem:[%s9] sm:$0xf]
    %v1220 = vld [vmem:[%s9 + $0x4] sm:$0xf]
    %v1221 = vpack.c.bf16 %v1204, %v1203
    %v1222 = vpack.c.bf16 %v1206, %v1205
    %v1223 = vpack.c.bf16 %v1208, %v1207
    %v1224 = vpack.c.bf16 %v1210, %v1209
    %v1225 = vpack.c.bf16 %v1212, %v1211
    %v1226 = vpack.c.bf16 %v1214, %v1213
    %v1227 = vpack.c.bf16 %v1216, %v1215
    %v1228 = vpack.c.bf16 %v1218, %v1217
    %v1229 = vld [vmem:[#allocation10] sm:$0xf]
    %v1230 = vld [vmem:[#allocation10 + $0x4] sm:$0xf]
    %v1231 = vld [vmem:[#allocation10 + $0x8] sm:$0xf]
    %v1232 = vld [vmem:[#allocation10 + $0xc] sm:$0xf]
    %v1233 = vld [vmem:[#allocation10 + $0x10] sm:$0xf]
    %v1234 = vld [vmem:[#allocation10 + $0x14] sm:$0xf]
    %v1235 = vld [vmem:[#allocation10 + $0x18] sm:$0xf]
    %v1236 = vld [vmem:[#allocation10 + $0x1c] sm:$0xf]
    %v1237 = vld [vmem:[#allocation10 + $0x20] sm:$0xf]
    %v1238 = vld [vmem:[#allocation10 + $0x24] sm:$0xf]
    %v1239 = vld [vmem:[#allocation10 + $0x28] sm:$0xf]
    %v1240 = vld [vmem:[#allocation10 + $0x2c] sm:$0xf]
    %v1241 = vld [vmem:[#allocation10 + $0x30] sm:$0xf]
    %v1242 = vld [vmem:[#allocation10 + $0x34] sm:$0xf]
    %v1243 = vld [vmem:[#allocation10 + $0x38] sm:$0xf]
    %v1244 = vld [vmem:[#allocation10 + $0x3c] sm:$0xf]
    %v1245 = vld [vmem:[%s12] sm:$0x1]
    %v1247 = vlaneseq
    %v1248 = vshrl.u32 %v1247, 7
    %v1249 = vsub.s32 0, %v1248
    %v1250 = vrot.slane %v1245, %v1249
    %v1268 = vunpack.c.l.b16 %v1229
    %v1269 = vunpack.c.l.b16 %v1230
    %v1270 = vunpack.c.l.b16 %v1231
    %v1271 = vunpack.c.l.b16 %v1232
    %v1272 = vunpack.c.l.b16 %v1233
    %v1273 = vunpack.c.l.b16 %v1234
    %v1274 = vunpack.c.l.b16 %v1235
    %v1275 = vunpack.c.l.b16 %v1236
    %v1276 = vunpack.c.l.b16 %v1237
    %v1277 = vunpack.c.l.b16 %v1238
    %v1278 = vunpack.c.l.b16 %v1239
    %v1279 = vunpack.c.l.b16 %v1240
    %v1280 = vunpack.c.l.b16 %v1241
    %v1281 = vunpack.c.l.b16 %v1242
    %v1282 = vunpack.c.l.b16 %v1243
    %v1283 = vunpack.c.l.b16 %v1244
    %v1284 = vpack.c.b16 %v1269, %v1268
    %v1285 = vpack.c.b16 %v1271, %v1270
    %v1286 = vpack.c.b16 %v1273, %v1272
    %v1287 = vpack.c.b16 %v1275, %v1274
    %v1288 = vpack.c.b16 %v1277, %v1276
    %v1289 = vpack.c.b16 %v1279, %v1278
    %v1290 = vpack.c.b16 %v1281, %v1280
    %v1291 = vpack.c.b16 %v1283, %v1282
    %1300 = vmatprep.subr.bf16.mxu0 0
    %1301 = vmatpush1.bf16.msra.mxu0 %v1291
    %1302 = vmatprep.subr.bf16.mxu0 0
    %1303 = vmatpush1.bf16.msra.mxu0 %v1290
    %1304 = vmatprep.subr.bf16.mxu0 0
    %1305 = vmatpush1.bf16.msra.mxu0 %v1289
    %1306 = vmatprep.subr.bf16.mxu0 0
    %1307 = vmatpush1.bf16.msra.mxu0 %v1288
    %1308 = vmatprep.subr.bf16.mxu0 0
    %1309 = vmatpush1.bf16.msra.mxu0 %v1287
    %1310 = vmatprep.subr.bf16.mxu0 0
    %1311 = vmatpush1.bf16.msra.mxu0 %v1286
    %1312 = vmatprep.subr.bf16.mxu0 0
    %1313 = vmatpush1.bf16.msra.mxu0 %v1285
    %1314 = vmatprep.subr.bf16.mxu0 0
    %1315 = vmatpush1.bf16.msra.mxu0 %v1284
    %1316 = vmatprep.subr.bf16.mxu0 0
    %1317 = vmatpush2.bf16.msra.mxu0 0
    %1318 = vmatprep.subr.bf16.mxu0 0
    %1319 = vmatpush2.bf16.msra.mxu0 0
    %1320 = vmatprep.subr.bf16.mxu0 0
    %1321 = vmatpush2.bf16.msra.mxu0 0
    %1322 = vmatprep.subr.bf16.mxu0 0
    %1323 = vmatpush2.bf16.msra.mxu0 0
    %1324 = vmatprep.subr.bf16.mxu0 0
    %1325 = vmatpush2.bf16.msra.mxu0 0
    %1326 = vmatprep.subr.bf16.mxu0 0
    %1327 = vmatpush2.bf16.msra.mxu0 0
    %1328 = vmatprep.subr.bf16.mxu0 0
    %1329 = vmatpush2.bf16.msra.mxu0 0
    %1330 = vmatprep.subr.bf16.mxu0 0
    %1331 = vmatpush2.bf16.msra.mxu0 0
    %1332 = vmatprep.mubr.bf16.mxu0 0
    %1333 = vmatmul.mubr.bf16.gmra.mxu0 %v1221
    %v1334 = vpop.f32.mrf.mxu0
    %v1335 = vadd.f32 %v1250, %v1334
    %v1336 = vpop.f32.mrf.mxu0
    %v1337 = vpop.f32.mrf.mxu0
    %v1338 = vadd.f32 %v1250, %v1337
    %v1339 = vpop.f32.mrf.mxu0
    %1340 = vmatprep.mubr.bf16.mxu0 0
    %1341 = vmatmul.mubr.bf16.gmra.mxu0 %v1222
    %v1342 = vpop.f32.mrf.mxu0
    %v1343 = vadd.f32 %v1250, %v1342
    %v1344 = vpop.f32.mrf.mxu0
    %v1345 = vpop.f32.mrf.mxu0
    %v1346 = vadd.f32 %v1250, %v1345
    %v1347 = vpop.f32.mrf.mxu0
    %1348 = vmatprep.mubr.bf16.mxu0 0
    %1349 = vmatmul.mubr.bf16.gmra.mxu0 %v1223
    %v1350 = vpop.f32.mrf.mxu0
    %v1351 = vadd.f32 %v1250, %v1350
    %v1352 = vpop.f32.mrf.mxu0
    %v1353 = vpop.f32.mrf.mxu0
    %v1354 = vadd.f32 %v1250, %v1353
    %v1355 = vpop.f32.mrf.mxu0
    %1356 = vmatprep.mubr.bf16.mxu0 0
    %1357 = vmatmul.mubr.bf16.gmra.mxu0 %v1224
    %v1358 = vpop.f32.mrf.mxu0
    %v1359 = vadd.f32 %v1250, %v1358
    %v1360 = vpop.f32.mrf.mxu0
    %v1361 = vpop.f32.mrf.mxu0
    %v1362 = vadd.f32 %v1250, %v1361
    %v1363 = vpop.f32.mrf.mxu0
    %1364 = vmatprep.mubr.bf16.mxu0 0
    %1365 = vmatmul.mubr.bf16.gmra.mxu0 %v1225
    %v1366 = vpop.f32.mrf.mxu0
    %v1367 = vadd.f32 %v1250, %v1366
    %v1368 = vpop.f32.mrf.mxu0
    %v1369 = vpop.f32.mrf.mxu0
    %v1370 = vadd.f32 %v1250, %v1369
    %v1371 = vpop.f32.mrf.mxu0
    %1372 = vmatprep.mubr.bf16.mxu0 0
    %1373 = vmatmul.mubr.bf16.gmra.mxu0 %v1226
    %v1374 = vpop.f32.mrf.mxu0
    %v1375 = vadd.f32 %v1250, %v1374
    %v1376 = vpop.f32.mrf.mxu0
    %v1377 = vpop.f32.mrf.mxu0
    %v1378 = vadd.f32 %v1250, %v1377
    %v1379 = vpop.f32.mrf.mxu0
    %1380 = vmatprep.mubr.bf16.mxu0 0
    %1381 = vmatmul.mubr.bf16.gmra.mxu0 %v1227
    %v1382 = vpop.f32.mrf.mxu0
    %v1383 = vadd.f32 %v1250, %v1382
    %v1384 = vpop.f32.mrf.mxu0
    %v1385 = vpop.f32.mrf.mxu0
    %v1386 = vadd.f32 %v1250, %v1385
    %v1387 = vpop.f32.mrf.mxu0
    %1388 = vmatprep.mubr.bf16.mxu0 0
    %1389 = vmatmul.mubr.bf16.gmra.mxu0 %v1228
    %v1390 = vpop.f32.mrf.mxu0
    %v1391 = vadd.f32 %v1250, %v1390
    %v1392 = vpop.f32.mrf.mxu0
    %v1393 = vpop.f32.mrf.mxu0
    %v1394 = vadd.f32 %v1250, %v1393
    %v1395 = vpop.f32.mrf.mxu0
    %1396 = vdwg.mxu0
    %v1397 = vmax.f32 %v1335, 0.0
    %v1398 = vmax.f32 %v1338, 0.0
    %v1399 = vmax.f32 %v1343, 0.0
    %v1400 = vmax.f32 %v1346, 0.0
    %v1401 = vmax.f32 %v1351, 0.0
    %v1402 = vmax.f32 %v1354, 0.0
    %v1403 = vmax.f32 %v1359, 0.0
    %v1404 = vmax.f32 %v1362, 0.0
    %v1405 = vmax.f32 %v1367, 0.0
    %v1406 = vmax.f32 %v1370, 0.0
    %v1407 = vmax.f32 %v1375, 0.0
    %v1408 = vmax.f32 %v1378, 0.0
    %v1409 = vmax.f32 %v1383, 0.0
    %v1410 = vmax.f32 %v1386, 0.0
    %v1411 = vmax.f32 %v1391, 0.0
    %v1412 = vmax.f32 %v1394, 0.0
    %v1413 = vpack.c.bf16 %v1398, %v1397
    %v1414 = vpack.c.bf16 %v1400, %v1399
    %v1415 = vpack.c.bf16 %v1402, %v1401
    %v1416 = vpack.c.bf16 %v1404, %v1403
    %v1417 = vpack.c.bf16 %v1406, %v1405
    %v1418 = vpack.c.bf16 %v1408, %v1407
    %v1419 = vpack.c.bf16 %v1410, %v1409
    %v1420 = vpack.c.bf16 %v1412, %v1411
    %v1423 = vunpack.c.l.b16 %v1219
    %v1424 = vunpack.c.l.b16 %v1220
    %v1425 = vpack.c.b16 %v1424, %v1423
    %1427 = vmatprep.subr.bf16.mxu0 0
    %1428 = vmatpush1.bf16.msra.mxu0 %v1420
    %1429 = vmatprep.subr.bf16.mxu0 0
    %1430 = vmatpush1.bf16.msra.mxu0 %v1419
    %1431 = vmatprep.subr.bf16.mxu0 0
    %1432 = vmatpush1.bf16.msra.mxu0 %v1418
    %1433 = vmatprep.subr.bf16.mxu0 0
    %1434 = vmatpush1.bf16.msra.mxu0 %v1417
    %1435 = vmatprep.subr.bf16.mxu0 0
    %1436 = vmatpush1.bf16.msra.mxu0 %v1416
    %1437 = vmatprep.subr.bf16.mxu0 0
    %1438 = vmatpush1.bf16.msra.mxu0 %v1415
    %1439 = vmatprep.subr.bf16.mxu0 0
    %1440 = vmatpush1.bf16.msra.mxu0 %v1414
    %1441 = vmatprep.subr.bf16.mxu0 0
    %1442 = vmatpush1.bf16.msra.mxu0 %v1413
    %1443 = vmatprep.subr.bf16.mxu0 0
    %1444 = vmatpush2.bf16.msra.mxu0 0
    %1445 = vmatprep.subr.bf16.mxu0 0
    %1446 = vmatpush2.bf16.msra.mxu0 0
    %1447 = vmatprep.subr.bf16.mxu0 0
    %1448 = vmatpush2.bf16.msra.mxu0 0
    %1449 = vmatprep.subr.bf16.mxu0 0
    %1450 = vmatpush2.bf16.msra.mxu0 0
    %1451 = vmatprep.subr.bf16.mxu0 0
    %1452 = vmatpush2.bf16.msra.mxu0 0
    %1453 = vmatprep.subr.bf16.mxu0 0
    %1454 = vmatpush2.bf16.msra.mxu0 0
    %1455 = vmatprep.subr.bf16.mxu0 0
    %1456 = vmatpush2.bf16.msra.mxu0 0
    %1457 = vmatprep.subr.bf16.mxu0 0
    %1458 = vmatpush2.bf16.msra.mxu0 0
    %1459 = vmatprep.mubr.bf16.mxu0 0
    %1460 = vmatmul.mubr.bf16.gmra.mxu0 %v1425
    %v1461 = vpop.f32.mrf.mxu0
    %v1462 = vadd.f32 0.0, %v1461
    %v1463 = vpop.f32.mrf.mxu0
    %v1464 = vpop.f32.mrf.mxu0
    %v1465 = vadd.f32 0.0, %v1464
    %v1466 = vpop.f32.mrf.mxu0
    %1467 = vdwg.mxu0
    %v1468 = vld [vmem:[%s10] sm:$0xff]
    %v1469 = vld [vmem:[%s10 + $0x8] sm:$0xff]
    %1471 = vset.pattern.permute.xlu0 0
    %1472 = vperm.xlu0 %1471, %v1468
    %v1473 = vpop.permute.xlu0 %1472
    %1476 = vset.pattern.permute.xlu0 0
    %1477 = vperm.xlu0 %1476, %v1469
    %v1478 = vpop.permute.xlu0 %1477
    %v1480 = vmul.f32 %v1462, %v1473
    %v1481 = vmul.f32 %v1465, %v1478
    %v1482 = vpack.c.bf16 %v1481, %v1480
    %v1483 = vld [vmem:[#allocation11] sm:$0xf]
    %v1484 = vld [vmem:[#allocation11 + $0x4] sm:$0xf]
    %v1485 = vld [vmem:[#allocation11 + $0x8] sm:$0xf]
    %v1486 = vld [vmem:[#allocation11 + $0xc] sm:$0xf]
    %v1487 = vld [vmem:[#allocation11 + $0x10] sm:$0xf]
    %v1488 = vld [vmem:[#allocation11 + $0x14] sm:$0xf]
    %v1489 = vld [vmem:[#allocation11 + $0x18] sm:$0xf]
    %v1490 = vld [vmem:[#allocation11 + $0x1c] sm:$0xf]
    %v1491 = vld [vmem:[#allocation11 + $0x20] sm:$0xf]
    %v1492 = vld [vmem:[#allocation11 + $0x24] sm:$0xf]
    %v1493 = vld [vmem:[#allocation11 + $0x28] sm:$0xf]
    %v1494 = vld [vmem:[#allocation11 + $0x2c] sm:$0xf]
    %v1495 = vld [vmem:[#allocation11 + $0x30] sm:$0xf]
    %v1496 = vld [vmem:[#allocation11 + $0x34] sm:$0xf]
    %v1497 = vld [vmem:[#allocation11 + $0x38] sm:$0xf]
    %v1498 = vld [vmem:[#allocation11 + $0x3c] sm:$0xf]
    %v1499 = vld [vmem:[#allocation11 + $0x40] sm:$0xf]
    %v1500 = vld [vmem:[#allocation11 + $0x44] sm:$0xf]
    %v1501 = vld [vmem:[#allocation11 + $0x48] sm:$0xf]
    %v1502 = vld [vmem:[#allocation11 + $0x4c] sm:$0xf]
    %v1503 = vld [vmem:[#allocation11 + $0x50] sm:$0xf]
    %v1504 = vld [vmem:[#allocation11 + $0x54] sm:$0xf]
    %v1505 = vld [vmem:[#allocation11 + $0x58] sm:$0xf]
    %v1506 = vld [vmem:[#allocation11 + $0x5c] sm:$0xf]
    %v1507 = vld [vmem:[#allocation11 + $0x60] sm:$0xf]
    %v1508 = vld [vmem:[#allocation11 + $0x64] sm:$0xf]
    %v1509 = vld [vmem:[#allocation11 + $0x68] sm:$0xf]
    %v1510 = vld [vmem:[#allocation11 + $0x6c] sm:$0xf]
    %v1511 = vld [vmem:[#allocation11 + $0x70] sm:$0xf]
    %v1512 = vld [vmem:[#allocation11 + $0x74] sm:$0xf]
    %v1513 = vld [vmem:[#allocation11 + $0x78] sm:$0xf]
    %v1514 = vld [vmem:[#allocation11 + $0x7c] sm:$0xf]
    %v1515 = vld [vmem:[%s14] sm:$0x1]
    %v1517 = vlaneseq
    %v1518 = vshrl.u32 %v1517, 7
    %v1519 = vsub.s32 0, %v1518
    %v1520 = vrot.slane %v1515, %v1519
    %v1554 = vunpack.c.l.b16 %v1483
    %v1555 = vunpack.c.l.b16 %v1484
    %v1556 = vunpack.c.l.b16 %v1485
    %v1557 = vunpack.c.l.b16 %v1486
    %v1558 = vunpack.c.l.b16 %v1487
    %v1559 = vunpack.c.l.b16 %v1488
    %v1560 = vunpack.c.l.b16 %v1489
    %v1561 = vunpack.c.l.b16 %v1490
    %v1562 = vunpack.c.l.b16 %v1491
    %v1563 = vunpack.c.l.b16 %v1492
    %v1564 = vunpack.c.l.b16 %v1493
    %v1565 = vunpack.c.l.b16 %v1494
    %v1566 = vunpack.c.l.b16 %v1495
    %v1567 = vunpack.c.l.b16 %v1496
    %v1568 = vunpack.c.l.b16 %v1497
    %v1569 = vunpack.c.l.b16 %v1498
    %v1570 = vunpack.c.l.b16 %v1499
    %v1571 = vunpack.c.l.b16 %v1500
    %v1572 = vunpack.c.l.b16 %v1501
    %v1573 = vunpack.c.l.b16 %v1502
    %v1574 = vunpack.c.l.b16 %v1503
    %v1575 = vunpack.c.l.b16 %v1504
    %v1576 = vunpack.c.l.b16 %v1505
    %v1577 = vunpack.c.l.b16 %v1506
    %v1578 = vunpack.c.l.b16 %v1507
    %v1579 = vunpack.c.l.b16 %v1508
    %v1580 = vunpack.c.l.b16 %v1509
    %v1581 = vunpack.c.l.b16 %v1510
    %v1582 = vunpack.c.l.b16 %v1511
    %v1583 = vunpack.c.l.b16 %v1512
    %v1584 = vunpack.c.l.b16 %v1513
    %v1585 = vunpack.c.l.b16 %v1514
    %v1586 = vpack.c.b16 %v1555, %v1554
    %v1587 = vpack.c.b16 %v1557, %v1556
    %v1588 = vpack.c.b16 %v1559, %v1558
    %v1589 = vpack.c.b16 %v1561, %v1560
    %v1590 = vpack.c.b16 %v1563, %v1562
    %v1591 = vpack.c.b16 %v1565, %v1564
    %v1592 = vpack.c.b16 %v1567, %v1566
    %v1593 = vpack.c.b16 %v1569, %v1568
    %v1594 = vpack.c.b16 %v1571, %v1570
    %v1595 = vpack.c.b16 %v1573, %v1572
    %v1596 = vpack.c.b16 %v1575, %v1574
    %v1597 = vpack.c.b16 %v1577, %v1576
    %v1598 = vpack.c.b16 %v1579, %v1578
    %v1599 = vpack.c.b16 %v1581, %v1580
    %v1600 = vpack.c.b16 %v1583, %v1582
    %v1601 = vpack.c.b16 %v1585, %v1584
    %1618 = vmatprep.subr.bf16.mxu0 0
    %1619 = vmatpush1.bf16.msra.mxu0 %v1593
    %1620 = vmatprep.subr.bf16.mxu0 0
    %1621 = vmatpush1.bf16.msra.mxu0 %v1592
    %1622 = vmatprep.subr.bf16.mxu0 0
    %1623 = vmatpush1.bf16.msra.mxu0 %v1591
    %1624 = vmatprep.subr.bf16.mxu0 0
    %1625 = vmatpush1.bf16.msra.mxu0 %v1590
    %1626 = vmatprep.subr.bf16.mxu0 0
    %1627 = vmatpush1.bf16.msra.mxu0 %v1589
    %1628 = vmatprep.subr.bf16.mxu0 0
    %1629 = vmatpush1.bf16.msra.mxu0 %v1588
    %1630 = vmatprep.subr.bf16.mxu0 0
    %1631 = vmatpush1.bf16.msra.mxu0 %v1587
    %1632 = vmatprep.subr.bf16.mxu0 0
    %1633 = vmatpush1.bf16.msra.mxu0 %v1586
    %1634 = vmatprep.subr.bf16.mxu0 0
    %1635 = vmatpush2.bf16.msra.mxu0 %v1601
    %1636 = vmatprep.subr.bf16.mxu0 0
    %1637 = vmatpush2.bf16.msra.mxu0 %v1600
    %1638 = vmatprep.subr.bf16.mxu0 0
    %1639 = vmatpush2.bf16.msra.mxu0 %v1599
    %1640 = vmatprep.subr.bf16.mxu0 0
    %1641 = vmatpush2.bf16.msra.mxu0 %v1598
    %1642 = vmatprep.subr.bf16.mxu0 0
    %1643 = vmatpush2.bf16.msra.mxu0 %v1597
    %1644 = vmatprep.subr.bf16.mxu0 0
    %1645 = vmatpush2.bf16.msra.mxu0 %v1596
    %1646 = vmatprep.subr.bf16.mxu0 0
    %1647 = vmatpush2.bf16.msra.mxu0 %v1595
    %1648 = vmatprep.subr.bf16.mxu0 0
    %1649 = vmatpush2.bf16.msra.mxu0 %v1594
    %1650 = vmatprep.mubr.bf16.mxu0 %v1221
    %1651 = vmatmul.mubr.bf16.gmra.mxu0 %v1482
    %v1652 = vpop.f32.mrf.mxu0
    %v1653 = vadd.f32 %v1520, %v1652
    %v1654 = vpop.f32.mrf.mxu0
    %v1655 = vpop.f32.mrf.mxu0
    %v1656 = vadd.f32 %v1520, %v1655
    %v1657 = vpop.f32.mrf.mxu0
    %1658 = vdwg.mxu0
    %v1659 = vmax.f32 %v1653, 0.0
    %v1660 = vmax.f32 %v1656, 0.0
    %v1661 = vmul.f32 %v1659, %v1659
    %v1662 = vmul.f32 %v1660, %v1660
    %1663 = vadd.xlane.f32.xlu0 %v1661
    %v1664 = vpop.xlane.xlu0 %1663
    %1665 = vadd.xlane.f32.xlu0 %v1662
    %v1666 = vpop.xlane.xlu0 %1665
    %vm1667 = vcmp.eq.f32.partialorder %v1664, 0.0
    %vm1668 = vcmp.eq.f32.partialorder %v1666, 0.0
    %v1669 = vrsqrt.pop %v1664
    %v1670 = vrsqrt.pop %v1666
    %v1671 = vsel %vm1667, 1.0, %v1669
    %v1672 = vsel %vm1668, 1.0, %v1670
    %v1673 = vmul.f32 %v1659, %v1671
    %v1674 = vmul.f32 %v1660, %v1672
    %v1675 = vadd.f32 %v316, %v1673
    %v1676 = vadd.f32 %v319, %v1674
    %v1677 = vld [vmem:[%s15] sm:$0x1]
    %v1679 = vlaneseq
    %v1680 = vshrl.u32 %v1679, 7
    %v1681 = vsub.s32 0, %v1680
    %v1682 = vrot.slane %v1677, %v1681
    %1684 = vmatprep.subr.mxu0 0.0
    %1685 = vmatpush1.xpose.msra.mxu0 0.0
    %1686 = vmatprep.subr.mxu0 0.0
    %1687 = vmatpush1.xpose.msra.mxu0 0.0
    %1688 = vmatprep.subr.mxu0 0.0
    %1689 = vmatpush1.xpose.msra.mxu0 0.0
    %1690 = vmatprep.subr.mxu0 0.0
    %1691 = vmatpush1.xpose.msra.mxu0 0.0
    %1692 = vmatprep.subr.mxu0 0.0
    %1693 = vmatpush1.xpose.msra.mxu0 0.0
    %1694 = vmatprep.subr.mxu0 0.0
    %1695 = vmatpush1.xpose.msra.mxu0 0.0
    %1696 = vmatprep.subr.mxu0 0.0
    %1697 = vmatpush1.xpose.msra.mxu0 0.0
    %1698 = vmatprep.subr.mxu0 0.0
    %1699 = vmatpush1.xpose.msra.mxu0 0.0
    %1700 = vmatprep.subr.mxu0 0.0
    %1701 = vmatpush1.xpose.msra.mxu0 0.0
    %1702 = vmatprep.subr.mxu0 0.0
    %1703 = vmatpush1.xpose.msra.mxu0 0.0
    %1704 = vmatprep.subr.mxu0 0.0
    %1705 = vmatpush1.xpose.msra.mxu0 0.0
    %1706 = vmatprep.subr.mxu0 0.0
    %1707 = vmatpush1.xpose.msra.mxu0 0.0
    %1708 = vmatprep.subr.mxu0 0.0
    %1709 = vmatpush1.xpose.msra.mxu0 0.0
    %1710 = vmatprep.subr.mxu0 0.0
    %1711 = vmatpush1.xpose.msra.mxu0 0.0
    %1712 = vmatprep.subr.mxu0 0.0
    %1713 = vmatpush1.xpose.msra.mxu0 %v1676
    %1714 = vmatprep.subr.mxu0 0.0
    %1715 = vmatpush1.xpose.msra.mxu0 %v1675
    %1716 = vmatprep.subr.mxu0 0.0
    %1717 = vmatpush2.xpose.msra.mxu0 0.0
    %1718 = vmatprep.subr.mxu0 0.0
    %1719 = vmatpush2.xpose.msra.mxu0 0.0
    %1720 = vmatprep.subr.mxu0 0.0
    %1721 = vmatpush2.xpose.msra.mxu0 0.0
    %1722 = vmatprep.subr.mxu0 0.0
    %1723 = vmatpush2.xpose.msra.mxu0 0.0
    %1724 = vmatprep.subr.mxu0 0.0
    %1725 = vmatpush2.xpose.msra.mxu0 0.0
    %1726 = vmatprep.subr.mxu0 0.0
    %1727 = vmatpush2.xpose.msra.mxu0 0.0
    %1728 = vmatprep.subr.mxu0 0.0
    %1729 = vmatpush2.xpose.msra.mxu0 0.0
    %1730 = vmatprep.subr.mxu0 0.0
    %1731 = vmatpush2.xpose.msra.mxu0 0.0
    %1732 = vmatprep.subr.mxu0 0.0
    %1733 = vmatpush2.xpose.msra.mxu0 0.0
    %1734 = vmatprep.subr.mxu0 0.0
    %1735 = vmatpush2.xpose.msra.mxu0 0.0
    %1736 = vmatprep.subr.mxu0 0.0
    %1737 = vmatpush2.xpose.msra.mxu0 0.0
    %1738 = vmatprep.subr.mxu0 0.0
    %1739 = vmatpush2.xpose.msra.mxu0 0.0
    %1740 = vmatprep.subr.mxu0 0.0
    %1741 = vmatpush2.xpose.msra.mxu0 0.0
    %1742 = vmatprep.subr.mxu0 0.0
    %1743 = vmatpush2.xpose.msra.mxu0 0.0
    %1744 = vmatprep.subr.mxu0 0.0
    %1745 = vmatpush2.xpose.msra.mxu0 0.0
    %1746 = vmatprep.subr.mxu0 0.0
    %1747 = vmatpush2.xpose.msra.mxu0 0.0
    %1748 = vmatprep.mubr.f32.mxu0 0.0
    %1749 = vmatmul.mubr.f32.gmra.mxu0 %v1675
    %v1750 = vpop.f32.mrf.mxu0
    %v1751 = vadd.f32 %v1682, %v1750
    %v1752 = vpop.f32.mrf.mxu0
    %1753 = vmatprep.mubr.f32.mxu0 0.0
    %1754 = vmatmul.mubr.f32.gmra.mxu0 %v1676
    %v1755 = vpop.f32.mrf.mxu0
    %v1756 = vadd.f32 %v1682, %v1755
    %v1757 = vpop.f32.mrf.mxu0
    %1758 = vdwg.mxu0
    %v1759 = vld [vmem:[%s16] sm:$0xff]
    %v1760 = vld [vmem:[%s16 + $0x8] sm:$0xff]
    %1762 = vset.pattern.permute.xlu0 0
    %1763 = vperm.xlu0 %1762, %v1759
    %v1764 = vpop.permute.xlu0 %1763
    %1767 = vset.pattern.permute.xlu0 0
    %1768 = vperm.xlu0 %1767, %v1760
    %v1769 = vpop.permute.xlu0 %1768
    %v1771 = vadd.f32 %v1751, %v1764
    %v1772 = vadd.f32 %v1756, %v1769
    %v1773 = vlaneseq
    %v1774 = vshrl.u32 %v1773, 7
    %v1775 = vadd.s32 %v1774, 8
    %v1776 = vld [vmem:[%s17] sm:$0x3]
    %v1777 = vlaneseq
    %v1778 = vshrl.u32 %v1777, 7
    %v1779 = vsub.s32 0, %v1778
    %v1780 = vrot.slane %v1776, %v1779
    %v1781 = vlaneseq
    %v1782 = vshrl.u32 %v1781, 7
    %v1783 = vsub.s32 1, %v1782
    %v1784 = vrot.slane %v1776, %v1783
    %vm1785 = vcmp.eq.s32.totalorder %v1774, %v1780
    %vm1786 = vcmp.eq.s32.totalorder %v1774, %v1784
    %vm1787 = vcmp.eq.s32.totalorder %v1775, %v1780
    %vm1788 = vcmp.eq.s32.totalorder %v1775, %v1784
    %v1789 = vsel %vm1785, 1, 0
    %v1790 = vsel %vm1786, 1, 0
    %v1791 = vsel %vm1787, 1, 0
    %v1792 = vsel %vm1788, 1, 0
    %v1793 = vcvt.s32.f32 %v1789
    %v1794 = vcvt.s32.f32 %v1790
    %v1795 = vcvt.s32.f32 %v1791
    %v1796 = vcvt.s32.f32 %v1792
    %v1797 = vld [vmem:[%s18] sm:$0x3]
    %v1798 = vlaneseq
    %v1799 = vshrl.u32 %v1798, 7
    %v1800 = vsub.s32 0, %v1799
    %v1801 = vrot.slane %v1797, %v1800
    %v1802 = vlaneseq
    %v1803 = vshrl.u32 %v1802, 7
    %v1804 = vsub.s32 1, %v1803
    %v1805 = vrot.slane %v1797, %v1804
    %vm1806 = vcmp.eq.s32.totalorder %v1774, %v1801
    %vm1807 = vcmp.eq.s32.totalorder %v1774, %v1805
    %vm1808 = vcmp.eq.s32.totalorder %v1775, %v1801
    %vm1809 = vcmp.eq.s32.totalorder %v1775, %v1805
    %v1810 = vsel %vm1806, 1, 0
    %v1811 = vsel %vm1807, 1, 0
    %v1812 = vsel %vm1808, 1, 0
    %v1813 = vsel %vm1809, 1, 0
    %v1814 = vcvt.s32.f32 %v1810
    %v1815 = vcvt.s32.f32 %v1811
    %v1816 = vcvt.s32.f32 %v1812
    %v1817 = vcvt.s32.f32 %v1813
    %vm1818 = vcmask 130048
    %v1820 = vsel %vm1818, %v1771, 0
    %v1823 = vsel %vm1818, %v1772, 0
    %1825 = vmatprep.subr.mxu0 0.0
    %1826 = vmatpush1.msra.mxu0 0.0
    %1827 = vmatprep.subr.mxu0 0.0
    %1828 = vmatpush1.msra.mxu0 0.0
    %1829 = vmatprep.subr.mxu0 0.0
    %1830 = vmatpush1.msra.mxu0 0.0
    %1831 = vmatprep.subr.mxu0 0.0
    %1832 = vmatpush1.msra.mxu0 0.0
    %1833 = vmatprep.subr.mxu0 0.0
    %1834 = vmatpush1.msra.mxu0 0.0
    %1835 = vmatprep.subr.mxu0 0.0
    %1836 = vmatpush1.msra.mxu0 0.0
    %1837 = vmatprep.subr.mxu0 0.0
    %1838 = vmatpush1.msra.mxu0 0.0
    %1839 = vmatprep.subr.mxu0 0.0
    %1840 = vmatpush1.msra.mxu0 0.0
    %1841 = vmatprep.subr.mxu0 0.0
    %1842 = vmatpush1.msra.mxu0 0.0
    %1843 = vmatprep.subr.mxu0 0.0
    %1844 = vmatpush1.msra.mxu0 0.0
    %1845 = vmatprep.subr.mxu0 0.0
    %1846 = vmatpush1.msra.mxu0 0.0
    %1847 = vmatprep.subr.mxu0 0.0
    %1848 = vmatpush1.msra.mxu0 0.0
    %1849 = vmatprep.subr.mxu0 0.0
    %1850 = vmatpush1.msra.mxu0 0.0
    %1851 = vmatprep.subr.mxu0 0.0
    %1852 = vmatpush1.msra.mxu0 0.0
    %1853 = vmatprep.subr.mxu0 %v1817
    %1854 = vmatpush1.msra.mxu0 %v1816
    %1855 = vmatprep.subr.mxu0 %v1815
    %1856 = vmatpush1.msra.mxu0 %v1814
    %1857 = vmatprep.subr.mxu0 0.0
    %1858 = vmatpush2.msra.mxu0 0.0
    %1859 = vmatprep.subr.mxu0 0.0
    %1860 = vmatpush2.msra.mxu0 0.0
    %1861 = vmatprep.subr.mxu0 0.0
    %1862 = vmatpush2.msra.mxu0 0.0
    %1863 = vmatprep.subr.mxu0 0.0
    %1864 = vmatpush2.msra.mxu0 0.0
    %1865 = vmatprep.subr.mxu0 0.0
    %1866 = vmatpush2.msra.mxu0 0.0
    %1867 = vmatprep.subr.mxu0 0.0
    %1868 = vmatpush2.msra.mxu0 0.0
    %1869 = vmatprep.subr.mxu0 0.0
    %1870 = vmatpush2.msra.mxu0 0.0
    %1871 = vmatprep.subr.mxu0 0.0
    %1872 = vmatpush2.msra.mxu0 0.0
    %1873 = vmatprep.subr.mxu0 0.0
    %1874 = vmatpush2.msra.mxu0 0.0
    %1875 = vmatprep.subr.mxu0 0.0
    %1876 = vmatpush2.msra.mxu0 0.0
    %1877 = vmatprep.subr.mxu0 0.0
    %1878 = vmatpush2.msra.mxu0 0.0
    %1879 = vmatprep.subr.mxu0 0.0
    %1880 = vmatpush2.msra.mxu0 0.0
    %1881 = vmatprep.subr.mxu0 0.0
    %1882 = vmatpush2.msra.mxu0 0.0
    %1883 = vmatprep.subr.mxu0 0.0
    %1884 = vmatpush2.msra.mxu0 0.0
    %1885 = vmatprep.subr.mxu0 0.0
    %1886 = vmatpush2.msra.mxu0 0.0
    %1887 = vmatprep.subr.mxu0 0.0
    %1888 = vmatpush2.msra.mxu0 0.0
    %1889 = vmatprep.mubr.f32.mxu0 0.0
    %1890 = vmatmul.mubr.f32.gmra.mxu0 %v1820
    %v1891 = vpop.f32.mrf.mxu0
    %v1892 = vadd.f32 0.0, %v1891
    %v1893 = vpop.f32.mrf.mxu0
    %v1894 = vadd.f32 0.0, %v1893
    %1895 = vmatprep.mubr.f32.mxu0 0.0
    %1896 = vmatmul.mubr.f32.gmra.mxu0 %v1823
    %v1897 = vpop.f32.mrf.mxu0
    %v1898 = vadd.f32 0.0, %v1897
    %v1899 = vpop.f32.mrf.mxu0
    %v1900 = vadd.f32 0.0, %v1899
    %1901 = vdwg.mxu0
    %v1902 = vmul.f32 %v1793, %v1892
    %v1903 = vmul.f32 %v1794, %v1894
    %v1904 = vmul.f32 %v1795, %v1898
    %v1905 = vmul.f32 %v1796, %v1900
    %v1906 = vadd.f32 %v1902, %v1904
    %v1907 = vrot.slane %v1906, 4
    %v1908 = vadd.f32 %v1906, %v1907
    %v1909 = vrot.slane %v1908, 2
    %v1910 = vadd.f32 %v1908, %v1909
    %v1911 = vrot.slane %v1910, 1
    %v1912 = vadd.f32 %v1910, %v1911
    %v1913 = vadd.f32 %v1903, %v1905
    %v1914 = vrot.slane %v1913, 4
    %v1915 = vadd.f32 %v1913, %v1914
    %v1916 = vrot.slane %v1915, 2
    %v1917 = vadd.f32 %v1915, %v1916
    %v1918 = vrot.slane %v1917, 1
    %v1919 = vadd.f32 %v1917, %v1918
    %v1920 = vsub.f32 %v1919, %v1912
    %v1921 = vadd.f32 %v1920, 1.0
    %v1922 = vmax.f32 %v1921, 0.0
    %1923 = vst [vmem:[#allocation13] sm:$0x1] %v1922
    // Predicated region
    $region102: #{tpu_custom_call.1} parent=1 // pred_check
      _
    $region103: #{tpu_custom_call.1} parent=1 // pred_check_branch
      %1925 = sbr.rel (0) target = $region105
    $region104: #{tpu_custom_call.1} parent=1 // pred_region
      %s1927 = ssub.s32 16, 16
      %1928 = vsyncadd [#allocation4], %s1927
      %s1930 = sshll.u32 [#allocation13], 4
      %s1931 = int_to_ptr.vmem [resolvable:$true] %s1930
      %1933 = dma.vmem_to_hbm [thread:$0]  %s1931, 16, %s19, [#allocation4]
    $region105: #{tpu_custom_call.1} parent=1 // pred_fallthru
      _
    // Predicated region
    $region106: #{tpu_custom_call.1} parent=1 // pred_check
      _
    $region107: #{tpu_custom_call.1} parent=1 // pred_check_branch
      %1935 = sbr.rel (0) target = $region109
    $region108: #{tpu_custom_call.1} parent=1 // pred_region
      %1936 = dma.done [#allocation4], 16
    $region109: #{tpu_custom_call.1} parent=1 // pred_fallthru
      _
    %1937 = vsyncpa [#allocation3], 1
    %1938 = vsyncpa [#allocation6], 1
    %1939 = vsyncpa [#allocation9], 1
    %1940 = vsyncpa [#allocation12], 1
    %1941 = vsyncpa [#allocation4], 1

</llo_original>
